<compile_context>
chip_gen: v6e
topology: v6e:2x2x1
jax: 0.10.0
libtpu: 0.0.40
codegen_flags: <defaults>
</compile_context>

<pallas_src>
import functools
import numpy as np

import jax
import jax.numpy as jnp
from jax.experimental import pallas as pl
from jax.experimental.pallas import tpu as pltpu

_LANE = 128


def _dot(a, b):
    return jnp.dot(a, b, preferred_element_type=jnp.float32)


# ----------------------------------------------------------------------------
# Fused Pallas kernel (channels x batch layout)
# ----------------------------------------------------------------------------
def _fused_kernel(*refs, boundary_clip, cat_cols, cat_sizes, group_specs):
    """Whole pyGAMINet forward for one batch tile.

    refs layout (inputs..., output):
      xt     (F, bn)   transposed input tile (batch on the 128-lane axis)
      stats  (F, 8)    cols: 0 min, 1 max, 2 mu, 3 1/std, 4 head weight,
                       5 total output bias (row 0 only)
      cb_k   (C_k, 1)  class bias of each categorical feature
      per packed subnet group g, group_specs[g] = (n_hidden, used_cats):
        A_z      (H0, F)     first layer with numeric placement folded in
        A_c      (H0, C_k)   one per categorical feature in used_cats
        b0       (H0, 1)
        (Wt, b) * (n_hidden-1)   block-diagonal hidden layers (transposed)
        Wlast_t  (S_g, d)    (only when n_hidden >= 1)
        blast    (S_g, 1)
        w_sub    (S_g, 1)    per-subnet head weights (switcher * weights)
      out    (1, bn)
    """
    pos = 0

    def nxt():
        nonlocal pos
        r = refs[pos]
        pos += 1
        return r

    xt_ref, stats_ref = nxt(), nxt()
    cb_refs = [nxt() for _ in cat_cols]
    groups = []
    for n_hidden, used_cats in group_specs:
        a_z = nxt()
        a_cats = [nxt() for _ in used_cats]
        b0 = nxt()
        mids = [(nxt(), nxt()) for _ in range(max(n_hidden - 1, 0))]
        last = (nxt(), nxt()) if n_hidden >= 1 else None
        wsub = nxt()
        groups.append((used_cats, a_z, a_cats, b0, mids, last, wsub, n_hidden))
    assert pos == len(refs) - 1
    o_ref = refs[-1]

    st = stats_ref[...]                                   # (F, 8)
    xt = xt_ref[...]                                      # (F, bn)
    if boundary_clip:
        xt = jnp.maximum(jnp.minimum(xt, st[:, 1:2]), st[:, 0:1])
    z = (xt - st[:, 2:3]) * st[:, 3:4]                    # (x - mu) * (1/std)
    nb = z.shape[1]

    # one-hot encodings (C, bn); same trunc-toward-zero int cast as torch.
    onehots = []
    for col, ncls in zip(cat_cols, cat_sizes):
        ids = z[col:col + 1, :].astype(jnp.int32)                     # (1, bn)
        rows = jax.lax.broadcasted_iota(jnp.int32, (ncls, nb), 0)     # (C, bn)
        onehots.append((rows == ids).astype(jnp.float32))

    # output bias (+ folded categorical global_bias * head-weight terms)
    acc = jnp.zeros((1, nb), jnp.float32) + st[0:1, 5:6]

    # categorical main effects: (one_hot . class_bias) * head_weight
    for col, oh, cb_ref in zip(cat_cols, onehots, cb_refs):
        sel = jnp.sum(oh * cb_ref[...], axis=0, keepdims=True)        # (1, bn)
        acc = acc + sel * st[col:col + 1, 4:5]

    # packed subnet groups (numeric main-effect subnets + interaction subnets)
    for used_cats, a_z, a_cats, b0, mids, last, wsub, n_hidden in groups:
        h = _dot(a_z[...], z) + b0[...]                   # folded first layer
        for cidx, a_c in zip(used_cats, a_cats):
            h = h + _dot(a_c[...], onehots[cidx])
        if n_hidden >= 1:
            h = jnp.maximum(h, 0.0)
            for wt_ref, b_ref in mids:                    # block-diag hidden
                h = jnp.maximum(_dot(wt_ref[...], h) + b_ref[...], 0.0)
            wl_ref, bl_ref = last
            h = _dot(wl_ref[...], h) + bl_ref[...]        # (S_g, bn)
        acc = acc + jnp.sum(h * wsub[...], axis=0, keepdims=True)

    o_ref[...] = acc


def _block_diag(mats):
    mats = [np.asarray(m, np.float32) for m in mats]
    rows = sum(m.shape[0] for m in mats)
    cols = sum(m.shape[1] for m in mats)
    out = np.zeros((rows, cols), np.float32)
    r = c = 0
    for m in mats:
        out[r:r + m.shape[0], c:c + m.shape[1]] = m
        r += m.shape[0]
        c += m.shape[1]
    return out


# ----------------------------------------------------------------------------
# Pure-JAX reference (mirrors the torch module op-for-op; verification only)
# ----------------------------------------------------------------------------
def _tensor_layer_ref(x, ws, bs):
    h = x
    for l in range(len(ws) - 1):
        h = jnp.maximum(jnp.einsum('snd,sdh->snh', h, ws[l]) + bs[l], 0.0)
    h = jnp.einsum('snd,sdh->snh', h, ws[-1]) + bs[-1]
    return h[:, :, 0].T


# ----------------------------------------------------------------------------
# pyGAMINet in JAX + Pallas
# ----------------------------------------------------------------------------
class PallasGAMINet:
    """Forward-pass re-implementation of pyGAMINet (activation = ReLU,
    main_effect=True, interaction=True, clarity=False, monotonicity=False)."""

    def __init__(self, key, nfeature_index_list, cfeature_index_list,
                 num_classes_list, subnet_size_main_effect,
                 subnet_size_interaction, boundary_clip,
                 min_value, max_value, mu_list, std_list, block_n=2048):
        self.nfeature_index_list = list(nfeature_index_list)
        self.cfeature_index_list = list(cfeature_index_list)
        self.num_classes_list = list(num_classes_list)
        self.n_features = len(self.nfeature_index_list) + len(self.cfeature_index_list)
        self.boundary_clip = boundary_clip
        self.min_value = min_value             # (1, F)
        self.max_value = max_value             # (1, F)
        self.mu_list = mu_list                 # (1, F)
        self.std_list = std_list               # (1, F)
        self._block_n = int(block_n)

        keys = iter(jax.random.split(key, 128))

        def init_tensor_layer(n_subnets, arch, n_input_nodes):
            # TODO(synk): torch uses orthogonal_ init for W and zeros_ for b;
            # deterministic gaussians are used here (values are synthetic).
            dims = [n_input_nodes] + list(arch) + [1]
            ws, bs = [], []
            for i in range(len(dims) - 1):
                ws.append(0.5 * jax.random.normal(
                    next(keys), (n_subnets, dims[i], dims[i + 1]), jnp.float32))
                bs.append(0.1 * jax.random.normal(
                    next(keys), (n_subnets, 1, dims[i + 1]), jnp.float32))
            return ws, bs

        if self.nfeature_index_list:
            self.main_w, self.main_b = init_tensor_layer(
                len(self.nfeature_index_list), subnet_size_main_effect, 1)
        else:
            self.main_w, self.main_b = [], []

        self.class_bias = [0.2 * jax.random.normal(next(keys), (c, 1), jnp.float32)
                           for c in self.num_classes_list]
        self.global_bias = [0.05 * jax.random.normal(next(keys), (1, 1), jnp.float32)
                            for _ in self.num_classes_list]

        self.main_effect_weights = jax.random.normal(
            next(keys), (self.n_features, 1), jnp.float32)
        self.main_effect_switcher = jnp.ones((self.n_features, 1), jnp.float32)
        self.output_bias = 0.3 * jax.random.normal(next(keys), (1, 1), jnp.float32)

        self._subnet_size_interaction = list(subnet_size_interaction)
        self._key_iter = keys
        self.interaction_status = False
        self._packed = None

    # -- pyGAMINet.init_interaction_blocks ------------------------------------
    def init_interaction_blocks(self, interaction_list):
        if len(interaction_list) == 0:
            return
        self.interaction_status = True
        self.interaction_list = list(interaction_list)
        self.n_interactions = len(interaction_list)
        self.n_inputs1, self.n_inputs2 = [], []
        for i1, i2 in interaction_list:
            self.n_inputs1.append(
                self.num_classes_list[self.cfeature_index_list.index(i1)]
                if i1 in self.cfeature_index_list else 1)
            self.n_inputs2.append(
                self.num_classes_list[self.cfeature_index_list.index(i2)]
                if i2 in self.cfeature_index_list else 1)
        self.max_n_inputs = max(a + b for a, b in zip(self.n_inputs1, self.n_inputs2))

        keys = self._key_iter
        dims = [self.max_n_inputs] + self._subnet_size_interaction + [1]
        self.inter_w, self.inter_b = [], []
        for i in range(len(dims) - 1):
            self.inter_w.append(0.5 * jax.random.normal(
                next(keys), (self.n_interactions, dims[i], dims[i + 1]), jnp.float32))
            self.inter_b.append(0.1 * jax.random.normal(
                next(keys), (self.n_interactions, 1, dims[i + 1]), jnp.float32))
        self.interaction_weights = jax.random.normal(
            next(keys), (self.n_interactions, 1), jnp.float32)
        self.interaction_switcher = jnp.ones((self.n_interactions, 1), jnp.float32)
        self._packed = None          # packed constants must be rebuilt

    # -- packing of parameters into fused-kernel constants --------------------
    def _pack_group(self, descs):
        """Pack one list of subnet descriptors into transposed, block-diagonal
        weights with the numeric / one-hot input placement folded (exactly,
        0/1 selection done at pack time) into the first layer."""
        f_total = self.n_features
        n_layers = len(descs[0]["ws"])          # n_hidden + 1
        n_hidden = n_layers - 1

        used_cats = sorted({idx for d in descs for kind, idx, _ in d["parts"]
                            if kind == "cat"})

        h0_widths = [int(d["ws"][0].shape[1]) for d in descs]
        h0_total = int(sum(h0_widths))
        row_off = np.concatenate([[0], np.cumsum(h0_widths)]).astype(int)

        a_z = np.zeros((h0_total, f_total), np.float32)
        a_cat = {k: np.zeros((h0_total, self.num_classes_list[k]), np.float32)
                 for k in used_cats}
        b0 = np.zeros((h0_total, 1), np.float32)
        for s, d in enumerate(descs):
            r0, r1 = int(row_off[s]), int(row_off[s + 1])
            w0 = np.asarray(d["ws"][0], np.float32)         # (n_in[+pad], h0)
            b0[r0:r1, 0] = np.asarray(d["bs"][0], np.float32)
            in_row = 0
            for kind, idx, width in d["parts"]:
                blk = w0[in_row:in_row + width, :].T        # (h0, width)
                if kind == "num":
                    a_z[r0:r1, idx] += blk[:, 0]
                else:
                    a_cat[idx][r0:r1, :] += blk
                in_row += width
            # rows of w0 beyond in_row correspond to the reference's zero
            # padding slots; they multiply zeros and are dropped exactly.

        arrays = [jnp.asarray(a_z)]
        arrays += [jnp.asarray(a_cat[k]) for k in used_cats]
        arrays.append(jnp.asarray(b0))

        for l in range(1, n_hidden):            # middle hidden layers
            w_bd = _block_diag([np.asarray(d["ws"][l]).T for d in descs])
            b_col = np.concatenate(
                [np.asarray(d["bs"][l], np.float32) for d in descs])[:, None]
            arrays += [jnp.asarray(w_bd), jnp.asarray(b_col)]

        if n_hidden >= 1:                        # final linear layer
            w_last = _block_diag([np.asarray(d["ws"][-1]).T for d in descs])
            b_last = np.concatenate(
                [np.asarray(d["bs"][-1], np.float32) for d in descs])[:, None]
            arrays += [jnp.asarray(w_last), jnp.asarray(b_last)]

        w_sub = np.asarray([float(d["head"]) for d in descs], np.float32)[:, None]
        arrays.append(jnp.asarray(w_sub))

        spec = (int(n_hidden), tuple(int(k) for k in used_cats))
        return spec, arrays

    def prepare(self):
        """Build the packed constant operands of the fused kernel.
        Re-run whenever parameters or the interaction structure change."""
        f_total = self.n_features
        mw = np.asarray(self.main_effect_switcher * self.main_effect_weights,
                        np.float32).ravel()

        main_descs = []
        for i, feat in enumerate(self.nfeature_index_list):
            main_descs.append(dict(
                parts=[("num", feat, 1)],
                ws=[w[i] for w in self.main_w],
                bs=[b[i, 0] for b in self.main_b],
                head=mw[feat]))

        inter_descs = []
        if self.interaction_status:
            iw = np.asarray(self.interaction_switcher * self.interaction_weights,
                            np.float32).ravel()
            for j, (i1, i2) in enumerate(self.interaction_list):
                parts = []
                for feat, n_in in ((i1, self.n_inputs1[j]), (i2, self.n_inputs2[j])):
                    if feat in self.cfeature_index_list:
                        parts.append(("cat", self.cfeature_index_list.index(feat), n_in))
                    else:
                        parts.append(("num", feat, 1))
                inter_descs.append(dict(
                    parts=parts,
                    ws=[w[j] for w in self.inter_w],
                    bs=[b[j, 0] for b in self.inter_b],
                    head=iw[j]))

        if main_descs and inter_descs and len(self.main_w) == len(self.inter_w):
            desc_groups = [main_descs + inter_descs]   # same depth -> one packed MLP
        else:
            desc_groups = [g for g in (main_descs, inter_descs) if g]

        # TODO(synk): for very large packed groups (hundreds of subnets), chunk
        # each group so block-diagonal hidden matrices stay ~128-512 columns
        # wide (keeps v7x's 64 MiB VMEM and avoids mostly-zero MXU passes).
        group_specs, group_arrays = [], []
        for descs in desc_groups:
            spec, arrays = self._pack_group(descs)
            group_specs.append(spec)
            group_arrays.extend(arrays)

        # categorical class biases (head weight applied in-kernel); categorical
        # global biases and the output bias fold into one scalar.
        cb_list = list(self.class_bias)
        extra_bias = 0.0
        for k, feat in enumerate(self.cfeature_index_list):
            extra_bias += float(self.global_bias[k][0, 0]) * float(mw[feat])
        total_bias = float(self.output_bias[0, 0]) + extra_bias

        stats = np.zeros((f_total, 8), np.float32)
        stats[:, 0] = np.asarray(self.min_value, np.float32).ravel()
        stats[:, 1] = np.asarray(self.max_value, np.float32).ravel()
        stats[:, 2] = np.asarray(self.mu_list, np.float32).ravel()
        stats[:, 3] = 1.0 / np.asarray(self.std_list, np.float32).ravel()  # 1/std
        stats[:, 4] = mw
        stats[0, 5] = total_bias

        self._packed = dict(stats=jnp.asarray(stats), cb_list=cb_list,
                            group_specs=tuple(group_specs),
                            group_arrays=group_arrays,
                            call_cache={})

    # -- batch tiling ----------------------------------------------------------
    def _choose_blocking(self, n_rows):
        def rup(v):
            return -(-v // _LANE) * _LANE
        if n_rows <= _LANE:
            bn = _LANE
        else:
            # aim for >= 2 grid steps so both v7x TensorCores get work;
            # large batches get 2048-wide (lane-dense) tiles.
            bn = max(_LANE, min(self._block_n, rup((n_rows + 1) // 2)))
        grid_n = -(-n_rows // bn)
        return bn, grid_n, bn * grid_n

    # -- fused Pallas forward (jitted wrapper) ----------------------------------
    def _build_forward_fn(self, n_rows, single_buffer):
        p = self._packed
        f_total = self.n_features
        bn, grid_n, n_pad = self._choose_blocking(n_rows)
        consts = [p["stats"]] + list(p["cb_list"]) + list(p["group_arrays"])

        def const_spec(shape):
            if single_buffer:
                # constants never change across grid steps -> one VMEM buffer
                return pl.BlockSpec(shape, lambda i: (0, 0),
                                    pipeline_mode=pl.Buffered(1))
            return pl.BlockSpec(shape, lambda i: (0, 0))

        in_specs = [pl.BlockSpec((f_total, bn), lambda i: (0, i))]
        in_specs += [const_spec(tuple(int(s) for s in c.shape)) for c in consts]

        kernel = functools.partial(
            _fused_kernel,
            boundary_clip=self.boundary_clip,
            cat_cols=tuple(self.cfeature_index_list),
            cat_sizes=tuple(self.num_classes_list),
            group_specs=p["group_specs"])

        call = pl.pallas_call(
            kernel,
            out_shape=jax.ShapeDtypeStruct((1, n_pad), jnp.float32),
            grid=(grid_n,),
            in_specs=in_specs,
            out_specs=pl.BlockSpec((1, bn), lambda i: (0, i)),
            compiler_params=pltpu.CompilerParams(
                dimension_semantics=("parallel",),
                vmem_limit_bytes=32 * 1024 * 1024),
        )

        @jax.jit
        def run(x, *cargs):
            xt = jnp.transpose(x)                           # (F, N): batch on lanes
            if n_pad != n_rows:
                xt = jnp.pad(xt, ((0, 0), (0, n_pad - n_rows)))
            out_row = call(xt, *cargs)                      # (1, n_pad), lane-dense
            return out_row[0, :n_rows][:, None]             # (N, 1)

        return run

    def _fused_forward(self, x):
        p = self._packed
        n_rows = int(x.shape[0])
        consts = [p["stats"]] + list(p["cb_list"]) + list(p["group_arrays"])
        fn = p["call_cache"].get(n_rows)
        if fn is not None:
            return fn(x, *consts)
        last_err = None
        # Try single-buffered constants first (halves constant VMEM); fall back
        # to default double-buffering if this jax/Mosaic build rejects it.
        for single_buffer in (True, False):
            try:
                fn = self._build_forward_fn(n_rows, single_buffer)
                out = jax.block_until_ready(fn(x, *consts))
            except Exception as err:            # noqa: BLE001
                last_err = err
                continue
            p["call_cache"][n_rows] = fn
            return out
        raise last_err

    def forward(self, inputs):
        if self._packed is None:
            self.prepare()
        return self._fused_forward(inputs)

    # -- pure-JAX reference (mirrors torch forward) ----------------------------
    def _interaction_preprocess_ref(self, z):
        n = z.shape[0]
        cols = []
        for j, (i1, i2) in enumerate(self.interaction_list):
            parts = []
            for feat, n_in in ((i1, self.n_inputs1[j]), (i2, self.n_inputs2[j])):
                if feat in self.cfeature_index_list:
                    parts.append(jax.nn.one_hot(z[:, feat].astype(jnp.int32),
                                                n_in, dtype=jnp.float32))
                else:
                    parts.append(z[:, feat:feat + 1])
            pad = self.max_n_inputs - (self.n_inputs1[j] + self.n_inputs2[j])
            if pad > 0:
                parts.append(jnp.zeros((n, pad), jnp.float32))
            cols.append(jnp.concatenate(parts, axis=1))
        pre = jnp.concatenate(cols, axis=1)
        return jnp.transpose(
            pre.reshape(-1, self.n_interactions, self.max_n_inputs), (1, 0, 2))

    def forward_reference(self, inputs):
        n = inputs.shape[0]
        x = inputs
        out = self.output_bias * jnp.ones((n, 1), jnp.float32)
        if self.boundary_clip:
            x = jnp.maximum(jnp.minimum(x, self.max_value), self.min_value)
        z = (x - self.mu_list) / self.std_list

        mw = (self.main_effect_switcher * self.main_effect_weights).ravel()
        main_out = jnp.zeros((n, self.n_features), jnp.float32)
        if self.nfeature_index_list:
            nidx = jnp.array(self.nfeature_index_list)
            x_num = z[:, nidx].T[:, :, None]
            main_out = main_out.at[:, nidx].set(
                _tensor_layer_ref(x_num, self.main_w, self.main_b))
        if self.cfeature_index_list:
            cols = []
            for k, feat in enumerate(self.cfeature_index_list):
                oh = jax.nn.one_hot(z[:, feat].astype(jnp.int32),
                                    self.num_classes_list[k], dtype=jnp.float32)
                cols.append(oh @ self.class_bias[k] + self.global_bias[k])
            main_out = main_out.at[:, jnp.array(self.cfeature_index_list)].set(
                jnp.concatenate(cols, axis=1))
        out = out + jnp.sum(main_out * mw[None, :], axis=1, keepdims=True)

        if self.interaction_status:
            iw = (self.interaction_switcher * self.interaction_weights).ravel()
            ti = self._interaction_preprocess_ref(z)
            inter_out = _tensor_layer_ref(ti, self.inter_w, self.inter_b)
            out = out + jnp.sum(inter_out * iw[None, :], axis=1, keepdims=True)
        # TODO(synk): get_mono_loss (torch.autograd.grad) and get_clarity_loss
        # are exactly 0 under the default forward flags and are omitted.
        return out


# ----------------------------------------------------------------------------
# Demo / test
# ----------------------------------------------------------------------------
def _check(tag, model, inputs, rtol=5e-4, atol=5e-4):
    out = jax.block_until_ready(model.forward(inputs))
    ref = jax.block_until_ready(model.forward_reference(inputs))
    np.testing.assert_allclose(np.asarray(out), np.asarray(ref),
                               rtol=rtol, atol=atol, err_msg=tag)
    return out


if __name__ == "__main__":
    key = jax.random.PRNGKey(0)
    k_model, k_model2, k_num, k_cat = jax.random.split(key, 4)

    N = 16
    nfeature_index_list = [0, 1, 2, 3, 4]
    cfeature_index_list = [5, 6]
    num_classes_list = [3, 4]

    # per-feature clip bounds / normalization stats (identity for categoricals)
    min_value = jnp.array([[-3.0] * 5 + [0.0, 0.0]], jnp.float32)
    max_value = jnp.array([[3.0] * 5 + [2.0, 3.0]], jnp.float32)
    mu_list = jnp.array([[0.1, -0.2, 0.05, 0.0, 0.3, 0.0, 0.0]], jnp.float32)
    std_list = jnp.array([[1.0, 1.5, 0.8, 1.2, 0.9, 1.0, 1.0]], jnp.float32)

    x_num = jax.random.normal(k_num, (N, len(nfeature_index_list)), jnp.float32)
    x_cat = jnp.stack(
        [jax.random.randint(jax.random.fold_in(k_cat, i), (N,), 0, c)
         .astype(jnp.float32) for i, c in enumerate(num_classes_list)], axis=1)
    inputs = jnp.concatenate([x_num, x_cat], axis=1)        # (N, F)

    # Model 1: same-depth architectures -> one merged block-diagonal MLP
    model = PallasGAMINet(
        k_model, nfeature_index_list, cfeature_index_list, num_classes_list,
        subnet_size_main_effect=[8, 4], subnet_size_interaction=[8, 4],
        boundary_clip=True, min_value=min_value, max_value=max_value,
        mu_list=mu_list, std_list=std_list)

    # (a) main effects only (no interactions initialized yet)
    _check("main-effects-only", model, inputs)

    # (b) numeric x numeric, numeric x categorical, categorical x categorical
    model.init_interaction_blocks([(0, 1), (2, 5), (5, 6)])
    out = _check("main+interactions (merged packed group)", model, inputs)
    assert out.shape == (N, 1), out.shape

    # Model 2: different-depth archs -> two packed groups in the same kernel
    model2 = PallasGAMINet(
        k_model2, nfeature_index_list, cfeature_index_list, num_classes_list,
        subnet_size_main_effect=[8, 4], subnet_size_interaction=[6],
        boundary_clip=True, min_value=min_value, max_value=max_value,
        mu_list=mu_list, std_list=std_list)
    model2.init_interaction_blocks([(0, 6), (3, 4)])
    _check("main+interactions (two packed groups)", model2, inputs)

    print("KERNEL_OK")
</pallas_src>

<mosaic_0001>
module attributes {stable_mosaic.version = 11 : i64} {
  func.func @_fused_kernel(%arg0: i32, %arg1: memref<7x128xf32, #tpu.memory_space<vmem>>, %arg2: memref<7x8xf32, #tpu.memory_space<vmem>>, %arg3: memref<3x1xf32, #tpu.memory_space<vmem>>, %arg4: memref<4x1xf32, #tpu.memory_space<vmem>>, %arg5: memref<40x7xf32, #tpu.memory_space<vmem>>, %arg6: memref<40x1xf32, #tpu.memory_space<vmem>>, %arg7: memref<20x40xf32, #tpu.memory_space<vmem>>, %arg8: memref<20x1xf32, #tpu.memory_space<vmem>>, %arg9: memref<5x20xf32, #tpu.memory_space<vmem>>, %arg10: memref<5x1xf32, #tpu.memory_space<vmem>>, %arg11: memref<5x1xf32, #tpu.memory_space<vmem>>, %arg12: memref<1x128xf32, #tpu.memory_space<vmem>>) attributes {dimension_semantics = [#tpu.dimension_semantics<parallel>], iteration_bounds = array<i64: 1>, scalar_prefetch = 0 : i64, scratch_operands = 0 : i64, tpu.core_type = #tpu.core_type<tc>, window_params = [{transform_indices = @transform_0, window_bounds = array<i64: 7, 128>}, {pipeline_mode = #tpu.pipeline_mode<synchronous>, transform_indices = @transform_1, window_bounds = array<i64: 7, 8>}, {pipeline_mode = #tpu.pipeline_mode<synchronous>, transform_indices = @transform_2, window_bounds = array<i64: 3, 1>}, {pipeline_mode = #tpu.pipeline_mode<synchronous>, transform_indices = @transform_3, window_bounds = array<i64: 4, 1>}, {pipeline_mode = #tpu.pipeline_mode<synchronous>, transform_indices = @transform_4, window_bounds = array<i64: 40, 7>}, {pipeline_mode = #tpu.pipeline_mode<synchronous>, transform_indices = @transform_5, window_bounds = array<i64: 40, 1>}, {pipeline_mode = #tpu.pipeline_mode<synchronous>, transform_indices = @transform_6, window_bounds = array<i64: 20, 40>}, {pipeline_mode = #tpu.pipeline_mode<synchronous>, transform_indices = @transform_7, window_bounds = array<i64: 20, 1>}, {pipeline_mode = #tpu.pipeline_mode<synchronous>, transform_indices = @transform_8, window_bounds = array<i64: 5, 20>}, {pipeline_mode = #tpu.pipeline_mode<synchronous>, transform_indices = @transform_9, window_bounds = array<i64: 5, 1>}, {pipeline_mode = #tpu.pipeline_mode<synchronous>, transform_indices = @transform_10, window_bounds = array<i64: 5, 1>}, {transform_indices = @transform_11, window_bounds = array<i64: 1, 128>}]} {
    %c0 = arith.constant 0 : index
    %c0_0 = arith.constant 0 : index
    %0 = vector.load %arg2[%c0, %c0_0] : memref<7x8xf32, #tpu.memory_space<vmem>>, vector<7x8xf32>
    %c0_1 = arith.constant 0 : index
    %c0_2 = arith.constant 0 : index
    %1 = vector.load %arg1[%c0_1, %c0_2] : memref<7x128xf32, #tpu.memory_space<vmem>>, vector<7x128xf32>
    %2 = vector.extract_strided_slice %0 {offsets = [0, 1], sizes = [7, 1], strides = [1, 1]} : vector<7x8xf32> to vector<7x1xf32>
    %3 = vector.broadcast %2 : vector<7x1xf32> to vector<7x128xf32>
    %4 = arith.minimumf %1, %3 : vector<7x128xf32>
    %5 = vector.extract_strided_slice %0 {offsets = [0, 0], sizes = [7, 1], strides = [1, 1]} : vector<7x8xf32> to vector<7x1xf32>
    %6 = vector.broadcast %5 : vector<7x1xf32> to vector<7x128xf32>
    %7 = arith.maximumf %4, %6 : vector<7x128xf32>
    %8 = vector.extract_strided_slice %0 {offsets = [0, 2], sizes = [7, 1], strides = [1, 1]} : vector<7x8xf32> to vector<7x1xf32>
    %9 = vector.broadcast %8 : vector<7x1xf32> to vector<7x128xf32>
    %10 = arith.subf %7, %9 : vector<7x128xf32>
    %11 = vector.extract_strided_slice %0 {offsets = [0, 3], sizes = [7, 1], strides = [1, 1]} : vector<7x8xf32> to vector<7x1xf32>
    %12 = vector.broadcast %11 : vector<7x1xf32> to vector<7x128xf32>
    %13 = arith.mulf %10, %12 : vector<7x128xf32>
    %14 = vector.extract_strided_slice %13 {offsets = [5, 0], sizes = [1, 128], strides = [1, 1]} : vector<7x128xf32> to vector<1x128xf32>
    %15 = arith.fptosi %14 : vector<1x128xf32> to vector<1x128xi32>
    %16 = tpu.iota {dimensions = array<i32: 0>} : vector<3x128xi32>
    %17 = vector.broadcast %15 : vector<1x128xi32> to vector<3x128xi32>
    %18 = arith.cmpi eq, %16, %17 : vector<3x128xi32>
    %19 = arith.extui %18 : vector<3x128xi1> to vector<3x128xi32>
    %20 = arith.sitofp %19 : vector<3x128xi32> to vector<3x128xf32>
    %21 = vector.extract_strided_slice %13 {offsets = [6, 0], sizes = [1, 128], strides = [1, 1]} : vector<7x128xf32> to vector<1x128xf32>
    %22 = arith.fptosi %21 : vector<1x128xf32> to vector<1x128xi32>
    %23 = tpu.iota {dimensions = array<i32: 0>} : vector<4x128xi32>
    %24 = vector.broadcast %22 : vector<1x128xi32> to vector<4x128xi32>
    %25 = arith.cmpi eq, %23, %24 : vector<4x128xi32>
    %26 = arith.extui %25 : vector<4x128xi1> to vector<4x128xi32>
    %27 = arith.sitofp %26 : vector<4x128xi32> to vector<4x128xf32>
    %cst = arith.constant 0.000000e+00 : f32
    %28 = vector.broadcast %cst : f32 to vector<1x128xf32>
    %29 = vector.extract_strided_slice %0 {offsets = [0, 5], sizes = [1, 1], strides = [1, 1]} : vector<7x8xf32> to vector<1x1xf32>
    %30 = vector.broadcast %29 : vector<1x1xf32> to vector<1x128xf32>
    %31 = arith.addf %28, %30 : vector<1x128xf32>
    %c0_3 = arith.constant 0 : index
    %c0_4 = arith.constant 0 : index
    %32 = vector.load %arg3[%c0_3, %c0_4] : memref<3x1xf32, #tpu.memory_space<vmem>>, vector<3x1xf32>
    %33 = vector.broadcast %32 : vector<3x1xf32> to vector<3x128xf32>
    %34 = arith.mulf %20, %33 : vector<3x128xf32>
    %cst_5 = arith.constant dense<0.000000e+00> : vector<128xf32>
    %35 = vector.multi_reduction <add>, %34, %cst_5 [0] : vector<3x128xf32> to vector<128xf32>
    %36 = vector.shape_cast %35 : vector<128xf32> to vector<1x128xf32>
    %37 = vector.extract_strided_slice %0 {offsets = [5, 4], sizes = [1, 1], strides = [1, 1]} : vector<7x8xf32> to vector<1x1xf32>
    %38 = vector.broadcast %37 : vector<1x1xf32> to vector<1x128xf32>
    %39 = arith.mulf %36, %38 : vector<1x128xf32>
    %40 = arith.addf %31, %39 : vector<1x128xf32>
    %c0_6 = arith.constant 0 : index
    %c0_7 = arith.constant 0 : index
    %41 = vector.load %arg4[%c0_6, %c0_7] : memref<4x1xf32, #tpu.memory_space<vmem>>, vector<4x1xf32>
    %42 = vector.broadcast %41 : vector<4x1xf32> to vector<4x128xf32>
    %43 = arith.mulf %27, %42 : vector<4x128xf32>
    %cst_8 = arith.constant dense<0.000000e+00> : vector<128xf32>
    %44 = vector.multi_reduction <add>, %43, %cst_8 [0] : vector<4x128xf32> to vector<128xf32>
    %45 = vector.shape_cast %44 : vector<128xf32> to vector<1x128xf32>
    %46 = vector.extract_strided_slice %0 {offsets = [6, 4], sizes = [1, 1], strides = [1, 1]} : vector<7x8xf32> to vector<1x1xf32>
    %47 = vector.broadcast %46 : vector<1x1xf32> to vector<1x128xf32>
    %48 = arith.mulf %45, %47 : vector<1x128xf32>
    %49 = arith.addf %40, %48 : vector<1x128xf32>
    %c0_9 = arith.constant 0 : index
    %c0_10 = arith.constant 0 : index
    %50 = vector.load %arg5[%c0_9, %c0_10] : memref<40x7xf32, #tpu.memory_space<vmem>>, vector<40x7xf32>
    %cst_11 = arith.constant dense<0.000000e+00> : vector<40x128xf32>
    %51 = tpu.matmul %50, %13, %cst_11 {dimension_numbers = #tpu.dot_dimension_numbers<[1], [0], [0], [1], [0, 0, 1, 1], [], []>} : vector<40x7xf32>, vector<7x128xf32>, vector<40x128xf32> -> vector<40x128xf32>
    %c0_12 = arith.constant 0 : index
    %c0_13 = arith.constant 0 : index
    %52 = vector.load %arg6[%c0_12, %c0_13] : memref<40x1xf32, #tpu.memory_space<vmem>>, vector<40x1xf32>
    %53 = vector.broadcast %52 : vector<40x1xf32> to vector<40x128xf32>
    %54 = arith.addf %51, %53 : vector<40x128xf32>
    %cst_14 = arith.constant 0.000000e+00 : f32
    %55 = vector.broadcast %cst_14 : f32 to vector<40x128xf32>
    %56 = arith.maximumf %54, %55 : vector<40x128xf32>
    %c0_15 = arith.constant 0 : index
    %c0_16 = arith.constant 0 : index
    %57 = vector.load %arg7[%c0_15, %c0_16] : memref<20x40xf32, #tpu.memory_space<vmem>>, vector<20x40xf32>
    %cst_17 = arith.constant dense<0.000000e+00> : vector<20x128xf32>
    %58 = tpu.matmul %57, %56, %cst_17 {dimension_numbers = #tpu.dot_dimension_numbers<[1], [0], [0], [1], [0, 0, 1, 1], [], []>} : vector<20x40xf32>, vector<40x128xf32>, vector<20x128xf32> -> vector<20x128xf32>
    %c0_18 = arith.constant 0 : index
    %c0_19 = arith.constant 0 : index
    %59 = vector.load %arg8[%c0_18, %c0_19] : memref<20x1xf32, #tpu.memory_space<vmem>>, vector<20x1xf32>
    %60 = vector.broadcast %59 : vector<20x1xf32> to vector<20x128xf32>
    %61 = arith.addf %58, %60 : vector<20x128xf32>
    %cst_20 = arith.constant 0.000000e+00 : f32
    %62 = vector.broadcast %cst_20 : f32 to vector<20x128xf32>
    %63 = arith.maximumf %61, %62 : vector<20x128xf32>
    %c0_21 = arith.constant 0 : index
    %c0_22 = arith.constant 0 : index
    %64 = vector.load %arg9[%c0_21, %c0_22] : memref<5x20xf32, #tpu.memory_space<vmem>>, vector<5x20xf32>
    %cst_23 = arith.constant dense<0.000000e+00> : vector<5x128xf32>
    %65 = tpu.matmul %64, %63, %cst_23 {dimension_numbers = #tpu.dot_dimension_numbers<[1], [0], [0], [1], [0, 0, 1, 1], [], []>} : vector<5x20xf32>, vector<20x128xf32>, vector<5x128xf32> -> vector<5x128xf32>
    %c0_24 = arith.constant 0 : index
    %c0_25 = arith.constant 0 : index
    %66 = vector.load %arg10[%c0_24, %c0_25] : memref<5x1xf32, #tpu.memory_space<vmem>>, vector<5x1xf32>
    %67 = vector.broadcast %66 : vector<5x1xf32> to vector<5x128xf32>
    %68 = arith.addf %65, %67 : vector<5x128xf32>
    %c0_26 = arith.constant 0 : index
    %c0_27 = arith.constant 0 : index
    %69 = vector.load %arg11[%c0_26, %c0_27] : memref<5x1xf32, #tpu.memory_space<vmem>>, vector<5x1xf32>
    %70 = vector.broadcast %69 : vector<5x1xf32> to vector<5x128xf32>
    %71 = arith.mulf %68, %70 : vector<5x128xf32>
    %cst_28 = arith.constant dense<0.000000e+00> : vector<128xf32>
    %72 = vector.multi_reduction <add>, %71, %cst_28 [0] : vector<5x128xf32> to vector<128xf32>
    %73 = vector.shape_cast %72 : vector<128xf32> to vector<1x128xf32>
    %74 = arith.addf %49, %73 : vector<1x128xf32>
    %c0_29 = arith.constant 0 : index
    %c0_30 = arith.constant 0 : index
    %75 = vector.load %arg12[%c0_29, %c0_30] : memref<1x128xf32, #tpu.memory_space<vmem>>, vector<1x128xf32>
    tpu.vector_store %arg12[%c0_29, %c0_30], %74 {strides = array<i32>} : memref<1x128xf32, #tpu.memory_space<vmem>>, vector<1x128xf32>,
    return
  }
  func.func @transform_0(%arg0: i32) -> (i32, i32) {
    %c0_i32 = arith.constant 0 : i32
    %c0_i32_0 = arith.constant 0 : i32
    return %c0_i32, %arg0 : i32, i32
  }
  func.func @transform_1(%arg0: i32) -> (i32, i32) {
    %c0_i32 = arith.constant 0 : i32
    %c0_i32_0 = arith.constant 0 : i32
    %c0_i32_1 = arith.constant 0 : i32
    return %c0_i32, %c0_i32_0 : i32, i32
  }
  func.func @transform_2(%arg0: i32) -> (i32, i32) {
    %c0_i32 = arith.constant 0 : i32
    %c0_i32_0 = arith.constant 0 : i32
    %c0_i32_1 = arith.constant 0 : i32
    return %c0_i32, %c0_i32_0 : i32, i32
  }
  func.func @transform_3(%arg0: i32) -> (i32, i32) {
    %c0_i32 = arith.constant 0 : i32
    %c0_i32_0 = arith.constant 0 : i32
    %c0_i32_1 = arith.constant 0 : i32
    return %c0_i32, %c0_i32_0 : i32, i32
  }
  func.func @transform_4(%arg0: i32) -> (i32, i32) {
    %c0_i32 = arith.constant 0 : i32
    %c0_i32_0 = arith.constant 0 : i32
    %c0_i32_1 = arith.constant 0 : i32
    return %c0_i32, %c0_i32_0 : i32, i32
  }
  func.func @transform_5(%arg0: i32) -> (i32, i32) {
    %c0_i32 = arith.constant 0 : i32
    %c0_i32_0 = arith.constant 0 : i32
    %c0_i32_1 = arith.constant 0 : i32
    return %c0_i32, %c0_i32_0 : i32, i32
  }
  func.func @transform_6(%arg0: i32) -> (i32, i32) {
    %c0_i32 = arith.constant 0 : i32
    %c0_i32_0 = arith.constant 0 : i32
    %c0_i32_1 = arith.constant 0 : i32
    return %c0_i32, %c0_i32_0 : i32, i32
  }
  func.func @transform_7(%arg0: i32) -> (i32, i32) {
    %c0_i32 = arith.constant 0 : i32
    %c0_i32_0 = arith.constant 0 : i32
    %c0_i32_1 = arith.constant 0 : i32
    return %c0_i32, %c0_i32_0 : i32, i32
  }
  func.func @transform_8(%arg0: i32) -> (i32, i32) {
    %c0_i32 = arith.constant 0 : i32
    %c0_i32_0 = arith.constant 0 : i32
    %c0_i32_1 = arith.constant 0 : i32
    return %c0_i32, %c0_i32_0 : i32, i32
  }
  func.func @transform_9(%arg0: i32) -> (i32, i32) {
    %c0_i32 = arith.constant 0 : i32
    %c0_i32_0 = arith.constant 0 : i32
    %c0_i32_1 = arith.constant 0 : i32
    return %c0_i32, %c0_i32_0 : i32, i32
  }
  func.func @transform_10(%arg0: i32) -> (i32, i32) {
    %c0_i32 = arith.constant 0 : i32
    %c0_i32_0 = arith.constant 0 : i32
    %c0_i32_1 = arith.constant 0 : i32
    return %c0_i32, %c0_i32_0 : i32, i32
  }
  func.func @transform_11(%arg0: i32) -> (i32, i32) {
    %c0_i32 = arith.constant 0 : i32
    %c0_i32_0 = arith.constant 0 : i32
    return %c0_i32, %arg0 : i32, i32
  }
}

module attributes {stable_mosaic.version = 11 : i64} {
  func.func @_fused_kernel(%arg0: i32, %arg1: memref<7x128xf32, #tpu.memory_space<vmem>>, %arg2: memref<7x8xf32, #tpu.memory_space<vmem>>, %arg3: memref<3x1xf32, #tpu.memory_space<vmem>>, %arg4: memref<4x1xf32, #tpu.memory_space<vmem>>, %arg5: memref<40x7xf32, #tpu.memory_space<vmem>>, %arg6: memref<40x1xf32, #tpu.memory_space<vmem>>, %arg7: memref<20x40xf32, #tpu.memory_space<vmem>>, %arg8: memref<20x1xf32, #tpu.memory_space<vmem>>, %arg9: memref<5x20xf32, #tpu.memory_space<vmem>>, %arg10: memref<5x1xf32, #tpu.memory_space<vmem>>, %arg11: memref<5x1xf32, #tpu.memory_space<vmem>>, %arg12: memref<1x128xf32, #tpu.memory_space<vmem>>) attributes {dimension_semantics = [#tpu.dimension_semantics<parallel>], iteration_bounds = array<i64: 1>, scalar_prefetch = 0 : i64, scratch_operands = 0 : i64, tpu.core_type = #tpu.core_type<tc>, window_params = [{transform_indices = @transform_0, window_bounds = array<i64: 7, 128>}, {pipeline_mode = #tpu.pipeline_mode<synchronous>, transform_indices = @transform_1, window_bounds = array<i64: 7, 8>}, {pipeline_mode = #tpu.pipeline_mode<synchronous>, transform_indices = @transform_2, window_bounds = array<i64: 3, 1>}, {pipeline_mode = #tpu.pipeline_mode<synchronous>, transform_indices = @transform_3, window_bounds = array<i64: 4, 1>}, {pipeline_mode = #tpu.pipeline_mode<synchronous>, transform_indices = @transform_4, window_bounds = array<i64: 40, 7>}, {pipeline_mode = #tpu.pipeline_mode<synchronous>, transform_indices = @transform_5, window_bounds = array<i64: 40, 1>}, {pipeline_mode = #tpu.pipeline_mode<synchronous>, transform_indices = @transform_6, window_bounds = array<i64: 20, 40>}, {pipeline_mode = #tpu.pipeline_mode<synchronous>, transform_indices = @transform_7, window_bounds = array<i64: 20, 1>}, {pipeline_mode = #tpu.pipeline_mode<synchronous>, transform_indices = @transform_8, window_bounds = array<i64: 5, 20>}, {pipeline_mode = #tpu.pipeline_mode<synchronous>, transform_indices = @transform_9, window_bounds = array<i64: 5, 1>}, {pipeline_mode = #tpu.pipeline_mode<synchronous>, transform_indices = @transform_10, window_bounds = array<i64: 5, 1>}, {transform_indices = @transform_11, window_bounds = array<i64: 1, 128>}]} {
    %c0 = arith.constant 0 : index
    %c0_0 = arith.constant 0 : index
    %0 = vector.load %arg2[%c0, %c0_0] : memref<7x8xf32, #tpu.memory_space<vmem>>, vector<7x8xf32>
    %c0_1 = arith.constant 0 : index
    %c0_2 = arith.constant 0 : index
    %1 = vector.load %arg1[%c0_1, %c0_2] : memref<7x128xf32, #tpu.memory_space<vmem>>, vector<7x128xf32>
    %2 = vector.extract_strided_slice %0 {offsets = [0, 1], sizes = [7, 1], strides = [1, 1]} : vector<7x8xf32> to vector<7x1xf32>
    %3 = vector.broadcast %2 : vector<7x1xf32> to vector<7x128xf32>
    %4 = arith.minimumf %1, %3 : vector<7x128xf32>
    %5 = vector.extract_strided_slice %0 {offsets = [0, 0], sizes = [7, 1], strides = [1, 1]} : vector<7x8xf32> to vector<7x1xf32>
    %6 = vector.broadcast %5 : vector<7x1xf32> to vector<7x128xf32>
    %7 = arith.maximumf %4, %6 : vector<7x128xf32>
    %8 = vector.extract_strided_slice %0 {offsets = [0, 2], sizes = [7, 1], strides = [1, 1]} : vector<7x8xf32> to vector<7x1xf32>
    %9 = vector.broadcast %8 : vector<7x1xf32> to vector<7x128xf32>
    %10 = arith.subf %7, %9 : vector<7x128xf32>
    %11 = vector.extract_strided_slice %0 {offsets = [0, 3], sizes = [7, 1], strides = [1, 1]} : vector<7x8xf32> to vector<7x1xf32>
    %12 = vector.broadcast %11 : vector<7x1xf32> to vector<7x128xf32>
    %13 = arith.mulf %10, %12 : vector<7x128xf32>
    %14 = vector.extract_strided_slice %13 {offsets = [5, 0], sizes = [1, 128], strides = [1, 1]} : vector<7x128xf32> to vector<1x128xf32>
    %15 = arith.fptosi %14 : vector<1x128xf32> to vector<1x128xi32>
    %16 = tpu.iota {dimensions = array<i32: 0>} : vector<3x128xi32>
    %17 = vector.broadcast %15 : vector<1x128xi32> to vector<3x128xi32>
    %18 = arith.cmpi eq, %16, %17 : vector<3x128xi32>
    %19 = arith.extui %18 : vector<3x128xi1> to vector<3x128xi32>
    %20 = arith.sitofp %19 : vector<3x128xi32> to vector<3x128xf32>
    %21 = vector.extract_strided_slice %13 {offsets = [6, 0], sizes = [1, 128], strides = [1, 1]} : vector<7x128xf32> to vector<1x128xf32>
    %22 = arith.fptosi %21 : vector<1x128xf32> to vector<1x128xi32>
    %23 = tpu.iota {dimensions = array<i32: 0>} : vector<4x128xi32>
    %24 = vector.broadcast %22 : vector<1x128xi32> to vector<4x128xi32>
    %25 = arith.cmpi eq, %23, %24 : vector<4x128xi32>
    %26 = arith.extui %25 : vector<4x128xi1> to vector<4x128xi32>
    %27 = arith.sitofp %26 : vector<4x128xi32> to vector<4x128xf32>
    %cst = arith.constant 0.000000e+00 : f32
    %28 = vector.broadcast %cst : f32 to vector<1x128xf32>
    %29 = vector.extract_strided_slice %0 {offsets = [0, 5], sizes = [1, 1], strides = [1, 1]} : vector<7x8xf32> to vector<1x1xf32>
    %30 = vector.broadcast %29 : vector<1x1xf32> to vector<1x128xf32>
    %31 = arith.addf %28, %30 : vector<1x128xf32>
    %c0_3 = arith.constant 0 : index
    %c0_4 = arith.constant 0 : index
    %32 = vector.load %arg3[%c0_3, %c0_4] : memref<3x1xf32, #tpu.memory_space<vmem>>, vector<3x1xf32>
    %33 = vector.broadcast %32 : vector<3x1xf32> to vector<3x128xf32>
    %34 = arith.mulf %20, %33 : vector<3x128xf32>
    %cst_5 = arith.constant dense<0.000000e+00> : vector<128xf32>
    %35 = vector.multi_reduction <add>, %34, %cst_5 [0] : vector<3x128xf32> to vector<128xf32>
    %36 = vector.shape_cast %35 : vector<128xf32> to vector<1x128xf32>
    %37 = vector.extract_strided_slice %0 {offsets = [5, 4], sizes = [1, 1], strides = [1, 1]} : vector<7x8xf32> to vector<1x1xf32>
    %38 = vector.broadcast %37 : vector<1x1xf32> to vector<1x128xf32>
    %39 = arith.mulf %36, %38 : vector<1x128xf32>
    %40 = arith.addf %31, %39 : vector<1x128xf32>
    %c0_6 = arith.constant 0 : index
    %c0_7 = arith.constant 0 : index
    %41 = vector.load %arg4[%c0_6, %c0_7] : memref<4x1xf32, #tpu.memory_space<vmem>>, vector<4x1xf32>
    %42 = vector.broadcast %41 : vector<4x1xf32> to vector<4x128xf32>
    %43 = arith.mulf %27, %42 : vector<4x128xf32>
    %cst_8 = arith.constant dense<0.000000e+00> : vector<128xf32>
    %44 = vector.multi_reduction <add>, %43, %cst_8 [0] : vector<4x128xf32> to vector<128xf32>
    %45 = vector.shape_cast %44 : vector<128xf32> to vector<1x128xf32>
    %46 = vector.extract_strided_slice %0 {offsets = [6, 4], sizes = [1, 1], strides = [1, 1]} : vector<7x8xf32> to vector<1x1xf32>
    %47 = vector.broadcast %46 : vector<1x1xf32> to vector<1x128xf32>
    %48 = arith.mulf %45, %47 : vector<1x128xf32>
    %49 = arith.addf %40, %48 : vector<1x128xf32>
    %c0_9 = arith.constant 0 : index
    %c0_10 = arith.constant 0 : index
    %50 = vector.load %arg5[%c0_9, %c0_10] : memref<40x7xf32, #tpu.memory_space<vmem>>, vector<40x7xf32>
    %cst_11 = arith.constant dense<0.000000e+00> : vector<40x128xf32>
    %51 = tpu.matmul %50, %13, %cst_11 {dimension_numbers = #tpu.dot_dimension_numbers<[1], [0], [0], [1], [0, 0, 1, 1], [], []>} : vector<40x7xf32>, vector<7x128xf32>, vector<40x128xf32> -> vector<40x128xf32>
    %c0_12 = arith.constant 0 : index
    %c0_13 = arith.constant 0 : index
    %52 = vector.load %arg6[%c0_12, %c0_13] : memref<40x1xf32, #tpu.memory_space<vmem>>, vector<40x1xf32>
    %53 = vector.broadcast %52 : vector<40x1xf32> to vector<40x128xf32>
    %54 = arith.addf %51, %53 : vector<40x128xf32>
    %cst_14 = arith.constant 0.000000e+00 : f32
    %55 = vector.broadcast %cst_14 : f32 to vector<40x128xf32>
    %56 = arith.maximumf %54, %55 : vector<40x128xf32>
    %c0_15 = arith.constant 0 : index
    %c0_16 = arith.constant 0 : index
    %57 = vector.load %arg7[%c0_15, %c0_16] : memref<20x40xf32, #tpu.memory_space<vmem>>, vector<20x40xf32>
    %cst_17 = arith.constant dense<0.000000e+00> : vector<20x128xf32>
    %58 = tpu.matmul %57, %56, %cst_17 {dimension_numbers = #tpu.dot_dimension_numbers<[1], [0], [0], [1], [0, 0, 1, 1], [], []>} : vector<20x40xf32>, vector<40x128xf32>, vector<20x128xf32> -> vector<20x128xf32>
    %c0_18 = arith.constant 0 : index
    %c0_19 = arith.constant 0 : index
    %59 = vector.load %arg8[%c0_18, %c0_19] : memref<20x1xf32, #tpu.memory_space<vmem>>, vector<20x1xf32>
    %60 = vector.broadcast %59 : vector<20x1xf32> to vector<20x128xf32>
    %61 = arith.addf %58, %60 : vector<20x128xf32>
    %cst_20 = arith.constant 0.000000e+00 : f32
    %62 = vector.broadcast %cst_20 : f32 to vector<20x128xf32>
    %63 = arith.maximumf %61, %62 : vector<20x128xf32>
    %c0_21 = arith.constant 0 : index
    %c0_22 = arith.constant 0 : index
    %64 = vector.load %arg9[%c0_21, %c0_22] : memref<5x20xf32, #tpu.memory_space<vmem>>, vector<5x20xf32>
    %cst_23 = arith.constant dense<0.000000e+00> : vector<5x128xf32>
    %65 = tpu.matmul %64, %63, %cst_23 {dimension_numbers = #tpu.dot_dimension_numbers<[1], [0], [0], [1], [0, 0, 1, 1], [], []>} : vector<5x20xf32>, vector<20x128xf32>, vector<5x128xf32> -> vector<5x128xf32>
    %c0_24 = arith.constant 0 : index
    %c0_25 = arith.constant 0 : index
    %66 = vector.load %arg10[%c0_24, %c0_25] : memref<5x1xf32, #tpu.memory_space<vmem>>, vector<5x1xf32>
    %67 = vector.broadcast %66 : vector<5x1xf32> to vector<5x128xf32>
    %68 = arith.addf %65, %67 : vector<5x128xf32>
    %c0_26 = arith.constant 0 : index
    %c0_27 = arith.constant 0 : index
    %69 = vector.load %arg11[%c0_26, %c0_27] : memref<5x1xf32, #tpu.memory_space<vmem>>, vector<5x1xf32>
    %70 = vector.broadcast %69 : vector<5x1xf32> to vector<5x128xf32>
    %71 = arith.mulf %68, %70 : vector<5x128xf32>
    %cst_28 = arith.constant dense<0.000000e+00> : vector<128xf32>
    %72 = vector.multi_reduction <add>, %71, %cst_28 [0] : vector<5x128xf32> to vector<128xf32>
    %73 = vector.shape_cast %72 : vector<128xf32> to vector<1x128xf32>
    %74 = arith.addf %49, %73 : vector<1x128xf32>
    %c0_29 = arith.constant 0 : index
    %c0_30 = arith.constant 0 : index
    %75 = vector.load %arg12[%c0_29, %c0_30] : memref<1x128xf32, #tpu.memory_space<vmem>>, vector<1x128xf32>
    tpu.vector_store %arg12[%c0_29, %c0_30], %74 {strides = array<i32>} : memref<1x128xf32, #tpu.memory_space<vmem>>, vector<1x128xf32>,
    return
  }
  func.func @transform_0(%arg0: i32) -> (i32, i32) {
    %c0_i32 = arith.constant 0 : i32
    %c0_i32_0 = arith.constant 0 : i32
    return %c0_i32, %arg0 : i32, i32
  }
  func.func @transform_1(%arg0: i32) -> (i32, i32) {
    %c0_i32 = arith.constant 0 : i32
    %c0_i32_0 = arith.constant 0 : i32
    %c0_i32_1 = arith.constant 0 : i32
    return %c0_i32, %c0_i32_0 : i32, i32
  }
  func.func @transform_2(%arg0: i32) -> (i32, i32) {
    %c0_i32 = arith.constant 0 : i32
    %c0_i32_0 = arith.constant 0 : i32
    %c0_i32_1 = arith.constant 0 : i32
    return %c0_i32, %c0_i32_0 : i32, i32
  }
  func.func @transform_3(%arg0: i32) -> (i32, i32) {
    %c0_i32 = arith.constant 0 : i32
    %c0_i32_0 = arith.constant 0 : i32
    %c0_i32_1 = arith.constant 0 : i32
    return %c0_i32, %c0_i32_0 : i32, i32
  }
  func.func @transform_4(%arg0: i32) -> (i32, i32) {
    %c0_i32 = arith.constant 0 : i32
    %c0_i32_0 = arith.constant 0 : i32
    %c0_i32_1 = arith.constant 0 : i32
    return %c0_i32, %c0_i32_0 : i32, i32
  }
  func.func @transform_5(%arg0: i32) -> (i32, i32) {
    %c0_i32 = arith.constant 0 : i32
    %c0_i32_0 = arith.constant 0 : i32
    %c0_i32_1 = arith.constant 0 : i32
    return %c0_i32, %c0_i32_0 : i32, i32
  }
  func.func @transform_6(%arg0: i32) -> (i32, i32) {
    %c0_i32 = arith.constant 0 : i32
    %c0_i32_0 = arith.constant 0 : i32
    %c0_i32_1 = arith.constant 0 : i32
    return %c0_i32, %c0_i32_0 : i32, i32
  }
  func.func @transform_7(%arg0: i32) -> (i32, i32) {
    %c0_i32 = arith.constant 0 : i32
    %c0_i32_0 = arith.constant 0 : i32
    %c0_i32_1 = arith.constant 0 : i32
    return %c0_i32, %c0_i32_0 : i32, i32
  }
  func.func @transform_8(%arg0: i32) -> (i32, i32) {
    %c0_i32 = arith.constant 0 : i32
    %c0_i32_0 = arith.constant 0 : i32
    %c0_i32_1 = arith.constant 0 : i32
    return %c0_i32, %c0_i32_0 : i32, i32
  }
  func.func @transform_9(%arg0: i32) -> (i32, i32) {
    %c0_i32 = arith.constant 0 : i32
    %c0_i32_0 = arith.constant 0 : i32
    %c0_i32_1 = arith.constant 0 : i32
    return %c0_i32, %c0_i32_0 : i32, i32
  }
  func.func @transform_10(%arg0: i32) -> (i32, i32) {
    %c0_i32 = arith.constant 0 : i32
    %c0_i32_0 = arith.constant 0 : i32
    %c0_i32_1 = arith.constant 0 : i32
    return %c0_i32, %c0_i32_0 : i32, i32
  }
  func.func @transform_11(%arg0: i32) -> (i32, i32) {
    %c0_i32 = arith.constant 0 : i32
    %c0_i32_0 = arith.constant 0 : i32
    return %c0_i32, %arg0 : i32, i32
  }
}

</mosaic_0001>

<llo_original>
// kernel: run.1
$region0: #{run.1}
  #allocation0 [shape = 'u32[]', space=smem, size = 0x4, offset = 0x4, fixed_abs, tag = 'smem constant byte address 0x4 - core index']
  #allocation1 [shape = 'u32[144,128]{1,0:T(1,128)}', space=vmem, size = 0x12000, scoped, tag = 'internal scratch']
  %s0 = inlined_call_operand.vmem [shape: f32[7,128], index: 0, kind: input, shape index: {}]
  %s1 = inlined_call_operand.vmem [shape: f32[7,8], index: 1, kind: input, shape index: {}]
  %s2 = inlined_call_operand.vmem [shape: f32[3,1], index: 2, kind: input, shape index: {}]
  %s3 = inlined_call_operand.vmem [shape: f32[4,1], index: 3, kind: input, shape index: {}]
  %s4 = inlined_call_operand.vmem [shape: f32[40,7], index: 4, kind: input, shape index: {}]
  %s5 = inlined_call_operand.vmem [shape: f32[40,1], index: 5, kind: input, shape index: {}]
  %s6 = inlined_call_operand.vmem [shape: f32[20,40], index: 6, kind: input, shape index: {}]
  %s7 = inlined_call_operand.vmem [shape: f32[20,1], index: 7, kind: input, shape index: {}]
  %s8 = inlined_call_operand.vmem [shape: f32[5,20], index: 8, kind: input, shape index: {}]
  %s9 = inlined_call_operand.vmem [shape: f32[5,1], index: 9, kind: input, shape index: {}]
  %s10 = inlined_call_operand.vmem [shape: f32[5,1], index: 10, kind: input, shape index: {}]
  %s11 = inlined_call_operand.vmem [shape: f32[1,128], index: 11, kind: output, shape index: {}]
  %s12 = sld [smem:[#allocation0]]
  $region54: #{run.1} parent=0
    _
  %s14 = ssub.s32 1, %s12
  %s15 = scalar_select 0, %s14, %s12
  // Predicated region
  $region2: #{run.1} parent=0 // pred_check
    _
  $region3: #{run.1} parent=0 // pred_check_branch
    %17 = sbr.rel (0) target = $region5
  $region4: #{run.1} parent=0 // pred_region
    _
  $region5: #{run.1} parent=0 // pred_fallthru
    _
  // Predicated region
  $region6: #{run.1} parent=0 // pred_check
    _
  $region7: #{run.1} parent=0 // pred_check_branch
    %19 = sbr.rel (0) target = $region9
  $region8: #{run.1} parent=0 // pred_region
    _
  $region9: #{run.1} parent=0 // pred_fallthru
    _
  // Predicated region
  $region10: #{run.1} parent=0 // pred_check
    _
  $region11: #{run.1} parent=0 // pred_check_branch
    %21 = sbr.rel (0) target = $region13
  $region12: #{run.1} parent=0 // pred_region
    _
  $region13: #{run.1} parent=0 // pred_fallthru
    _
  // Predicated region
  $region14: #{run.1} parent=0 // pred_check
    _
  $region15: #{run.1} parent=0 // pred_check_branch
    %23 = sbr.rel (0) target = $region17
  $region16: #{run.1} parent=0 // pred_region
    _
  $region17: #{run.1} parent=0 // pred_fallthru
    _
  // Predicated region
  $region18: #{run.1} parent=0 // pred_check
    _
  $region19: #{run.1} parent=0 // pred_check_branch
    %25 = sbr.rel (0) target = $region21
  $region20: #{run.1} parent=0 // pred_region
    _
  $region21: #{run.1} parent=0 // pred_fallthru
    _
  // Predicated region
  $region22: #{run.1} parent=0 // pred_check
    _
  $region23: #{run.1} parent=0 // pred_check_branch
    %27 = sbr.rel (0) target = $region25
  $region24: #{run.1} parent=0 // pred_region
    _
  $region25: #{run.1} parent=0 // pred_fallthru
    _
  // Predicated region
  $region26: #{run.1} parent=0 // pred_check
    _
  $region27: #{run.1} parent=0 // pred_check_branch
    %29 = sbr.rel (0) target = $region29
  $region28: #{run.1} parent=0 // pred_region
    _
  $region29: #{run.1} parent=0 // pred_fallthru
    _
  // Predicated region
  $region30: #{run.1} parent=0 // pred_check
    _
  $region31: #{run.1} parent=0 // pred_check_branch
    %31 = sbr.rel (0) target = $region33
  $region32: #{run.1} parent=0 // pred_region
    _
  $region33: #{run.1} parent=0 // pred_fallthru
    _
  // Predicated region
  $region34: #{run.1} parent=0 // pred_check
    _
  $region35: #{run.1} parent=0 // pred_check_branch
    %33 = sbr.rel (0) target = $region37
  $region36: #{run.1} parent=0 // pred_region
    _
  $region37: #{run.1} parent=0 // pred_fallthru
    _
  // Predicated region
  $region38: #{run.1} parent=0 // pred_check
    _
  $region39: #{run.1} parent=0 // pred_check_branch
    %35 = sbr.rel (0) target = $region41
  $region40: #{run.1} parent=0 // pred_region
    _
  $region41: #{run.1} parent=0 // pred_fallthru
    _
  // Predicated region
  $region42: #{run.1} parent=0 // pred_check
    _
  $region43: #{run.1} parent=0 // pred_check_branch
    %37 = sbr.rel (0) target = $region45
  $region44: #{run.1} parent=0 // pred_region
    _
  $region45: #{run.1} parent=0 // pred_fallthru
    _
  %v38 = vld [vmem:[%s1] sm:$0x7f]
  %v39 = vld [vmem:[%s0] sm:$0x7f]
  %41 = vset.pattern.permute.xlu0 1
  %42 = vperm.xlu0 %41, %v38
  %v43 = vpop.permute.xlu0 %42
  %v45 = vmin.f32 %v39, %v43
  %46 = vset.pattern.permute.xlu0 0
  %47 = vperm.xlu0 %46, %v38
  %v48 = vpop.permute.xlu0 %47
  %v50 = vmax.f32 %v45, %v48
  %51 = vset.pattern.permute.xlu0 2
  %52 = vperm.xlu0 %51, %v38
  %v53 = vpop.permute.xlu0 %52
  %v55 = vsub.f32 %v50, %v53
  %56 = vset.pattern.permute.xlu0 3
  %57 = vperm.xlu0 %56, %v38
  %v58 = vpop.permute.xlu0 %57
  %v60 = vmul.f32 %v55, %v58
  %v61 = vcvt.f32.s32.to.zero.pseudo %v60
  %v62 = vlaneseq
  %v63 = vshrl.u32 %v62, 7
  %v64 = vlaneseq
  %v65 = vshrl.u32 %v64, 7
  %v66 = vsub.s32 5, %v65
  %v67 = vrot.slane %v61, %v66
  %vm68 = vcmp.eq.s32.totalorder %v63, %v67
  %v69 = vsel %vm68, 1, 0
  %v70 = vcvt.s32.f32 %v69
  %v71 = vlaneseq
  %v72 = vshrl.u32 %v71, 7
  %v73 = vsub.s32 6, %v72
  %v74 = vrot.slane %v61, %v73
  %vm75 = vcmp.eq.s32.totalorder %v63, %v74
  %v76 = vsel %vm75, 1, 0
  %v77 = vcvt.s32.f32 %v76
  %78 = vset.pattern.permute.xlu0 5
  %79 = vperm.xlu0 %78, %v38
  %v80 = vpop.permute.xlu0 %79
  %v82 = vadd.f32 %v80, 0.0
  %v83 = vld [vmem:[%s2] sm:$0x7]
  %85 = vset.pattern.permute.xlu0 0
  %86 = vperm.xlu0 %85, %v83
  %v87 = vpop.permute.xlu0 %86
  %v89 = vmul.f32 %v70, %v87
  %vm90 = vcmask 1042432
  %v91 = vsel %vm90, %v89, 0.0
  %v92 = vrot.slane %v91, 4
  %v93 = vadd.f32 %v91, %v92
  %v94 = vrot.slane %v93, 2
  %v95 = vadd.f32 %v93, %v94
  %v96 = vrot.slane %v95, 1
  %v97 = vadd.f32 %v95, %v96
  %98 = vset.pattern.permute.xlu0 4
  %99 = vperm.xlu0 %98, %v38
  %v100 = vpop.permute.xlu0 %99
  %v102 = vmul.f32 %v97, %v100
  %v104 = vrot.slane %v102, 5
  %v106 = vadd.f32 %v82, %v104
  %v107 = vld [vmem:[%s3] sm:$0xf]
  %109 = vset.pattern.permute.xlu0 0
  %110 = vperm.xlu0 %109, %v107
  %v111 = vpop.permute.xlu0 %110
  %v113 = vmul.f32 %v77, %v111
  %vm114 = vcmask 1043456
  %v115 = vsel %vm114, %v113, 0.0
  %v116 = vrot.slane %v115, 4
  %v117 = vadd.f32 %v115, %v116
  %v118 = vrot.slane %v117, 2
  %v119 = vadd.f32 %v117, %v118
  %v120 = vrot.slane %v119, 1
  %v121 = vadd.f32 %v119, %v120
  %v122 = vmul.f32 %v121, %v100
  %v124 = vrot.slane %v122, 6
  %v126 = vadd.f32 %v106, %v124
  %v127 = vld [vmem:[%s4] sm:$0xff]
  %v128 = vld [vmem:[%s4 + $0x8] sm:$0xff]
  %v129 = vld [vmem:[%s4 + $0x10] sm:$0xff]
  %v130 = vld [vmem:[%s4 + $0x18] sm:$0xff]
  %v131 = vld [vmem:[%s4 + $0x20] sm:$0xff]
  %v132 = vld [vmem:[%s5] sm:$0xff]
  %v133 = vld [vmem:[%s5 + $0x8] sm:$0xff]
  %v134 = vld [vmem:[%s5 + $0x10] sm:$0xff]
  %v135 = vld [vmem:[%s5 + $0x18] sm:$0xff]
  %v136 = vld [vmem:[%s5 + $0x20] sm:$0xff]
  %138 = vset.pattern.permute.xlu0 0
  %139 = vperm.xlu0 %138, %v132
  %v140 = vpop.permute.xlu0 %139
  %143 = vset.pattern.permute.xlu0 0
  %144 = vperm.xlu0 %143, %v133
  %v145 = vpop.permute.xlu0 %144
  %148 = vset.pattern.permute.xlu0 0
  %149 = vperm.xlu0 %148, %v134
  %v150 = vpop.permute.xlu0 %149
  %153 = vset.pattern.permute.xlu0 0
  %154 = vperm.xlu0 %153, %v135
  %v155 = vpop.permute.xlu0 %154
  %158 = vset.pattern.permute.xlu0 0
  %159 = vperm.xlu0 %158, %v136
  %v160 = vpop.permute.xlu0 %159
  %vm162 = vcmask 56320
  %v164 = vsel %vm162, %v127, 0
  %v167 = vsel %vm162, %v128, 0
  %v170 = vsel %vm162, %v129, 0
  %v173 = vsel %vm162, %v130, 0
  %v176 = vsel %vm162, %v131, 0
  %vm178 = vcmask 1046528
  %v180 = vsel %vm178, %v60, 0
  %182 = vmatprep.subr.mxu0 0.0
  %183 = vmatpush1.msra.mxu0 0.0
  %184 = vmatprep.subr.mxu0 0.0
  %185 = vmatpush1.msra.mxu0 0.0
  %186 = vmatprep.subr.mxu0 0.0
  %187 = vmatpush1.msra.mxu0 0.0
  %188 = vmatprep.subr.mxu0 0.0
  %189 = vmatpush1.msra.mxu0 0.0
  %190 = vmatprep.subr.mxu0 0.0
  %191 = vmatpush1.msra.mxu0 0.0
  %192 = vmatprep.subr.mxu0 0.0
  %193 = vmatpush1.msra.mxu0 0.0
  %194 = vmatprep.subr.mxu0 0.0
  %195 = vmatpush1.msra.mxu0 0.0
  %196 = vmatprep.subr.mxu0 0.0
  %197 = vmatpush1.msra.mxu0 0.0
  %198 = vmatprep.subr.mxu0 0.0
  %199 = vmatpush1.msra.mxu0 0.0
  %200 = vmatprep.subr.mxu0 0.0
  %201 = vmatpush1.msra.mxu0 0.0
  %202 = vmatprep.subr.mxu0 0.0
  %203 = vmatpush1.msra.mxu0 0.0
  %204 = vmatprep.subr.mxu0 0.0
  %205 = vmatpush1.msra.mxu0 0.0
  %206 = vmatprep.subr.mxu0 0.0
  %207 = vmatpush1.msra.mxu0 0.0
  %208 = vmatprep.subr.mxu0 0.0
  %209 = vmatpush1.msra.mxu0 0.0
  %210 = vmatprep.subr.mxu0 0.0
  %211 = vmatpush1.msra.mxu0 0.0
  %212 = vmatprep.subr.mxu0 0.0
  %213 = vmatpush1.msra.mxu0 %v180
  %214 = vmatprep.subr.mxu0 0.0
  %215 = vmatpush2.msra.mxu0 0.0
  %216 = vmatprep.subr.mxu0 0.0
  %217 = vmatpush2.msra.mxu0 0.0
  %218 = vmatprep.subr.mxu0 0.0
  %219 = vmatpush2.msra.mxu0 0.0
  %220 = vmatprep.subr.mxu0 0.0
  %221 = vmatpush2.msra.mxu0 0.0
  %222 = vmatprep.subr.mxu0 0.0
  %223 = vmatpush2.msra.mxu0 0.0
  %224 = vmatprep.subr.mxu0 0.0
  %225 = vmatpush2.msra.mxu0 0.0
  %226 = vmatprep.subr.mxu0 0.0
  %227 = vmatpush2.msra.mxu0 0.0
  %228 = vmatprep.subr.mxu0 0.0
  %229 = vmatpush2.msra.mxu0 0.0
  %230 = vmatprep.subr.mxu0 0.0
  %231 = vmatpush2.msra.mxu0 0.0
  %232 = vmatprep.subr.mxu0 0.0
  %233 = vmatpush2.msra.mxu0 0.0
  %234 = vmatprep.subr.mxu0 0.0
  %235 = vmatpush2.msra.mxu0 0.0
  %236 = vmatprep.subr.mxu0 0.0
  %237 = vmatpush2.msra.mxu0 0.0
  %238 = vmatprep.subr.mxu0 0.0
  %239 = vmatpush2.msra.mxu0 0.0
  %240 = vmatprep.subr.mxu0 0.0
  %241 = vmatpush2.msra.mxu0 0.0
  %242 = vmatprep.subr.mxu0 0.0
  %243 = vmatpush2.msra.mxu0 0.0
  %244 = vmatprep.subr.mxu0 0.0
  %245 = vmatpush2.msra.mxu0 0.0
  %246 = vmatprep.mubr.f32.mxu0 0.0
  %247 = vmatmul.mubr.f32.gmra.mxu0 %v164
  %v248 = vpop.f32.mrf.mxu0
  %v249 = vadd.f32 %v140, %v248
  %v250 = vpop.f32.mrf.mxu0
  %251 = vmatprep.mubr.f32.mxu0 0.0
  %252 = vmatmul.mubr.f32.gmra.mxu0 %v167
  %v253 = vpop.f32.mrf.mxu0
  %v254 = vadd.f32 %v145, %v253
  %v255 = vpop.f32.mrf.mxu0
  %256 = vmatprep.mubr.f32.mxu0 0.0
  %257 = vmatmul.mubr.f32.gmra.mxu0 %v170
  %v258 = vpop.f32.mrf.mxu0
  %v259 = vadd.f32 %v150, %v258
  %v260 = vpop.f32.mrf.mxu0
  %261 = vmatprep.mubr.f32.mxu0 0.0
  %262 = vmatmul.mubr.f32.gmra.mxu0 %v173
  %v263 = vpop.f32.mrf.mxu0
  %v264 = vadd.f32 %v155, %v263
  %v265 = vpop.f32.mrf.mxu0
  %266 = vmatprep.mubr.f32.mxu0 0.0
  %267 = vmatmul.mubr.f32.gmra.mxu0 %v176
  %v268 = vpop.f32.mrf.mxu0
  %v269 = vadd.f32 %v160, %v268
  %v270 = vpop.f32.mrf.mxu0
  %271 = vdwg.mxu0
  %v272 = vmax.f32 %v249, 0.0
  %v273 = vmax.f32 %v254, 0.0
  %v274 = vmax.f32 %v259, 0.0
  %v275 = vmax.f32 %v264, 0.0
  %v276 = vmax.f32 %v269, 0.0
  %v277 = vld [vmem:[%s6] sm:$0xff]
  %v278 = vld [vmem:[%s6 + $0x8] sm:$0xff]
  %v279 = vld [vmem:[%s6 + $0x10] sm:$0xf]
  %v280 = vld [vmem:[%s7] sm:$0xff]
  %v281 = vld [vmem:[%s7 + $0x8] sm:$0xff]
  %v282 = vld [vmem:[%s7 + $0x10] sm:$0xf]
  %284 = vset.pattern.permute.xlu0 0
  %285 = vperm.xlu0 %284, %v280
  %v286 = vpop.permute.xlu0 %285
  %289 = vset.pattern.permute.xlu0 0
  %290 = vperm.xlu0 %289, %v281
  %v291 = vpop.permute.xlu0 %290
  %294 = vset.pattern.permute.xlu0 0
  %295 = vperm.xlu0 %294, %v282
  %v296 = vpop.permute.xlu0 %295
  %vm298 = vcmask 326656
  %v300 = vsel %vm298, %v277, 0
  %v303 = vsel %vm298, %v278, 0
  %v306 = vsel %vm298, %v279, 0
  %308 = vmatprep.subr.mxu0 0.0
  %309 = vmatpush1.msra.mxu0 0.0
  %310 = vmatprep.subr.mxu0 0.0
  %311 = vmatpush1.msra.mxu0 0.0
  %312 = vmatprep.subr.mxu0 0.0
  %313 = vmatpush1.msra.mxu0 0.0
  %314 = vmatprep.subr.mxu0 0.0
  %315 = vmatpush1.msra.mxu0 0.0
  %316 = vmatprep.subr.mxu0 0.0
  %317 = vmatpush1.msra.mxu0 0.0
  %318 = vmatprep.subr.mxu0 0.0
  %319 = vmatpush1.msra.mxu0 0.0
  %320 = vmatprep.subr.mxu0 0.0
  %321 = vmatpush1.msra.mxu0 0.0
  %322 = vmatprep.subr.mxu0 0.0
  %323 = vmatpush1.msra.mxu0 0.0
  %324 = vmatprep.subr.mxu0 0.0
  %325 = vmatpush1.msra.mxu0 0.0
  %326 = vmatprep.subr.mxu0 0.0
  %327 = vmatpush1.msra.mxu0 0.0
  %328 = vmatprep.subr.mxu0 0.0
  %329 = vmatpush1.msra.mxu0 0.0
  %330 = vmatprep.subr.mxu0 0.0
  %331 = vmatpush1.msra.mxu0 %v276
  %332 = vmatprep.subr.mxu0 0.0
  %333 = vmatpush1.msra.mxu0 %v275
  %334 = vmatprep.subr.mxu0 0.0
  %335 = vmatpush1.msra.mxu0 %v274
  %336 = vmatprep.subr.mxu0 0.0
  %337 = vmatpush1.msra.mxu0 %v273
  %338 = vmatprep.subr.mxu0 0.0
  %339 = vmatpush1.msra.mxu0 %v272
  %340 = vmatprep.subr.mxu0 0.0
  %341 = vmatpush2.msra.mxu0 0.0
  %342 = vmatprep.subr.mxu0 0.0
  %343 = vmatpush2.msra.mxu0 0.0
  %344 = vmatprep.subr.mxu0 0.0
  %345 = vmatpush2.msra.mxu0 0.0
  %346 = vmatprep.subr.mxu0 0.0
  %347 = vmatpush2.msra.mxu0 0.0
  %348 = vmatprep.subr.mxu0 0.0
  %349 = vmatpush2.msra.mxu0 0.0
  %350 = vmatprep.subr.mxu0 0.0
  %351 = vmatpush2.msra.mxu0 0.0
  %352 = vmatprep.subr.mxu0 0.0
  %353 = vmatpush2.msra.mxu0 0.0
  %354 = vmatprep.subr.mxu0 0.0
  %355 = vmatpush2.msra.mxu0 0.0
  %356 = vmatprep.subr.mxu0 0.0
  %357 = vmatpush2.msra.mxu0 0.0
  %358 = vmatprep.subr.mxu0 0.0
  %359 = vmatpush2.msra.mxu0 0.0
  %360 = vmatprep.subr.mxu0 0.0
  %361 = vmatpush2.msra.mxu0 0.0
  %362 = vmatprep.subr.mxu0 0.0
  %363 = vmatpush2.msra.mxu0 0.0
  %364 = vmatprep.subr.mxu0 0.0
  %365 = vmatpush2.msra.mxu0 0.0
  %366 = vmatprep.subr.mxu0 0.0
  %367 = vmatpush2.msra.mxu0 0.0
  %368 = vmatprep.subr.mxu0 0.0
  %369 = vmatpush2.msra.mxu0 0.0
  %370 = vmatprep.subr.mxu0 0.0
  %371 = vmatpush2.msra.mxu0 0.0
  %372 = vmatprep.mubr.f32.mxu0 0.0
  %373 = vmatmul.mubr.f32.gmra.mxu0 %v300
  %v374 = vpop.f32.mrf.mxu0
  %v375 = vadd.f32 %v286, %v374
  %v376 = vpop.f32.mrf.mxu0
  %377 = vmatprep.mubr.f32.mxu0 0.0
  %378 = vmatmul.mubr.f32.gmra.mxu0 %v303
  %v379 = vpop.f32.mrf.mxu0
  %v380 = vadd.f32 %v291, %v379
  %v381 = vpop.f32.mrf.mxu0
  %382 = vmatprep.mubr.f32.mxu0 0.0
  %383 = vmatmul.mubr.f32.gmra.mxu0 %v306
  %v384 = vpop.f32.mrf.mxu0
  %v385 = vadd.f32 %v296, %v384
  %v386 = vpop.f32.mrf.mxu0
  %387 = vdwg.mxu0
  %v388 = vmax.f32 %v375, 0.0
  %v389 = vmax.f32 %v380, 0.0
  %v390 = vmax.f32 %v385, 0.0
  %v391 = vld [vmem:[%s8] sm:$0x1f]
  %v392 = vld [vmem:[%s9] sm:$0x1f]
  %394 = vset.pattern.permute.xlu0 0
  %395 = vperm.xlu0 %394, %v392
  %v396 = vpop.permute.xlu0 %395
  %vm398 = vcmask 162816
  %v400 = vsel %vm398, %v391, 0
  %v403 = vsel %vm114, %v390, 0
  %405 = vmatprep.subr.mxu0 0.0
  %406 = vmatpush1.msra.mxu0 0.0
  %407 = vmatprep.subr.mxu0 0.0
  %408 = vmatpush1.msra.mxu0 0.0
  %409 = vmatprep.subr.mxu0 0.0
  %410 = vmatpush1.msra.mxu0 0.0
  %411 = vmatprep.subr.mxu0 0.0
  %412 = vmatpush1.msra.mxu0 0.0
  %413 = vmatprep.subr.mxu0 0.0
  %414 = vmatpush1.msra.mxu0 0.0
  %415 = vmatprep.subr.mxu0 0.0
  %416 = vmatpush1.msra.mxu0 0.0
  %417 = vmatprep.subr.mxu0 0.0
  %418 = vmatpush1.msra.mxu0 0.0
  %419 = vmatprep.subr.mxu0 0.0
  %420 = vmatpush1.msra.mxu0 0.0
  %421 = vmatprep.subr.mxu0 0.0
  %422 = vmatpush1.msra.mxu0 0.0
  %423 = vmatprep.subr.mxu0 0.0
  %424 = vmatpush1.msra.mxu0 0.0
  %425 = vmatprep.subr.mxu0 0.0
  %426 = vmatpush1.msra.mxu0 0.0
  %427 = vmatprep.subr.mxu0 0.0
  %428 = vmatpush1.msra.mxu0 0.0
  %429 = vmatprep.subr.mxu0 0.0
  %430 = vmatpush1.msra.mxu0 0.0
  %431 = vmatprep.subr.mxu0 0.0
  %432 = vmatpush1.msra.mxu0 %v403
  %433 = vmatprep.subr.mxu0 0.0
  %434 = vmatpush1.msra.mxu0 %v389
  %435 = vmatprep.subr.mxu0 0.0
  %436 = vmatpush1.msra.mxu0 %v388
  %437 = vmatprep.subr.mxu0 0.0
  %438 = vmatpush2.msra.mxu0 0.0
  %439 = vmatprep.subr.mxu0 0.0
  %440 = vmatpush2.msra.mxu0 0.0
  %441 = vmatprep.subr.mxu0 0.0
  %442 = vmatpush2.msra.mxu0 0.0
  %443 = vmatprep.subr.mxu0 0.0
  %444 = vmatpush2.msra.mxu0 0.0
  %445 = vmatprep.subr.mxu0 0.0
  %446 = vmatpush2.msra.mxu0 0.0
  %447 = vmatprep.subr.mxu0 0.0
  %448 = vmatpush2.msra.mxu0 0.0
  %449 = vmatprep.subr.mxu0 0.0
  %450 = vmatpush2.msra.mxu0 0.0
  %451 = vmatprep.subr.mxu0 0.0
  %452 = vmatpush2.msra.mxu0 0.0
  %453 = vmatprep.subr.mxu0 0.0
  %454 = vmatpush2.msra.mxu0 0.0
  %455 = vmatprep.subr.mxu0 0.0
  %456 = vmatpush2.msra.mxu0 0.0
  %457 = vmatprep.subr.mxu0 0.0
  %458 = vmatpush2.msra.mxu0 0.0
  %459 = vmatprep.subr.mxu0 0.0
  %460 = vmatpush2.msra.mxu0 0.0
  %461 = vmatprep.subr.mxu0 0.0
  %462 = vmatpush2.msra.mxu0 0.0
  %463 = vmatprep.subr.mxu0 0.0
  %464 = vmatpush2.msra.mxu0 0.0
  %465 = vmatprep.subr.mxu0 0.0
  %466 = vmatpush2.msra.mxu0 0.0
  %467 = vmatprep.subr.mxu0 0.0
  %468 = vmatpush2.msra.mxu0 0.0
  %469 = vmatprep.mubr.f32.mxu0 0.0
  %470 = vmatmul.mubr.f32.gmra.mxu0 %v400
  %v471 = vpop.f32.mrf.mxu0
  %v472 = vadd.f32 %v396, %v471
  %v473 = vpop.f32.mrf.mxu0
  %474 = vdwg.mxu0
  %v475 = vld [vmem:[%s10] sm:$0x1f]
  %477 = vset.pattern.permute.xlu0 0
  %478 = vperm.xlu0 %477, %v475
  %v479 = vpop.permute.xlu0 %478
  %v481 = vmul.f32 %v472, %v479
  %vm482 = vcmask 1044480
  %v483 = vsel %vm482, %v481, 0.0
  %v484 = vrot.slane %v483, 4
  %v485 = vadd.f32 %v483, %v484
  %v486 = vrot.slane %v485, 2
  %v487 = vadd.f32 %v485, %v486
  %v488 = vrot.slane %v487, 1
  %v489 = vadd.f32 %v487, %v488
  %v490 = vadd.f32 %v126, %v489
  %491 = vst [vmem:[%s11] sm:$0x1] %v490
  // Predicated region
  $region46: #{run.1} parent=0 // pred_check
    _
  $region47: #{run.1} parent=0 // pred_check_branch
    %493 = sbr.rel (0) target = $region49
  $region48: #{run.1} parent=0 // pred_region
    _
  $region49: #{run.1} parent=0 // pred_fallthru
    _
  // Predicated region
  $region50: #{run.1} parent=0 // pred_check
    _
  $region51: #{run.1} parent=0 // pred_check_branch
    %495 = sbr.rel (0) target = $region53
  $region52: #{run.1} parent=0 // pred_region
    _
  $region53: #{run.1} parent=0 // pred_fallthru
    _

// kernel: run.1
$region0: #{run.1}
  #allocation0 [shape = 'u32[]', space=smem, size = 0x4, offset = 0x4, fixed_abs, tag = 'smem constant byte address 0x4 - core index']
  #allocation1 [shape = 'u32[144,128]{1,0:T(1,128)}', space=vmem, size = 0x12000, scoped, tag = 'internal scratch']
  %s0 = inlined_call_operand.vmem [shape: f32[7,128], index: 0, kind: input, shape index: {}]
  %s1 = inlined_call_operand.vmem [shape: f32[7,8], index: 1, kind: input, shape index: {}]
  %s2 = inlined_call_operand.vmem [shape: f32[3,1], index: 2, kind: input, shape index: {}]
  %s3 = inlined_call_operand.vmem [shape: f32[4,1], index: 3, kind: input, shape index: {}]
  %s4 = inlined_call_operand.vmem [shape: f32[40,7], index: 4, kind: input, shape index: {}]
  %s5 = inlined_call_operand.vmem [shape: f32[40,1], index: 5, kind: input, shape index: {}]
  %s6 = inlined_call_operand.vmem [shape: f32[20,40], index: 6, kind: input, shape index: {}]
  %s7 = inlined_call_operand.vmem [shape: f32[20,1], index: 7, kind: input, shape index: {}]
  %s8 = inlined_call_operand.vmem [shape: f32[5,20], index: 8, kind: input, shape index: {}]
  %s9 = inlined_call_operand.vmem [shape: f32[5,1], index: 9, kind: input, shape index: {}]
  %s10 = inlined_call_operand.vmem [shape: f32[5,1], index: 10, kind: input, shape index: {}]
  %s11 = inlined_call_operand.vmem [shape: f32[1,128], index: 11, kind: output, shape index: {}]
  %s12 = sld [smem:[#allocation0]]
  $region54: #{run.1} parent=0
    _
  %s14 = ssub.s32 1, %s12
  %s15 = scalar_select 0, %s14, %s12
  // Predicated region
  $region2: #{run.1} parent=0 // pred_check
    _
  $region3: #{run.1} parent=0 // pred_check_branch
    %17 = sbr.rel (0) target = $region5
  $region4: #{run.1} parent=0 // pred_region
    _
  $region5: #{run.1} parent=0 // pred_fallthru
    _
  // Predicated region
  $region6: #{run.1} parent=0 // pred_check
    _
  $region7: #{run.1} parent=0 // pred_check_branch
    %19 = sbr.rel (0) target = $region9
  $region8: #{run.1} parent=0 // pred_region
    _
  $region9: #{run.1} parent=0 // pred_fallthru
    _
  // Predicated region
  $region10: #{run.1} parent=0 // pred_check
    _
  $region11: #{run.1} parent=0 // pred_check_branch
    %21 = sbr.rel (0) target = $region13
  $region12: #{run.1} parent=0 // pred_region
    _
  $region13: #{run.1} parent=0 // pred_fallthru
    _
  // Predicated region
  $region14: #{run.1} parent=0 // pred_check
    _
  $region15: #{run.1} parent=0 // pred_check_branch
    %23 = sbr.rel (0) target = $region17
  $region16: #{run.1} parent=0 // pred_region
    _
  $region17: #{run.1} parent=0 // pred_fallthru
    _
  // Predicated region
  $region18: #{run.1} parent=0 // pred_check
    _
  $region19: #{run.1} parent=0 // pred_check_branch
    %25 = sbr.rel (0) target = $region21
  $region20: #{run.1} parent=0 // pred_region
    _
  $region21: #{run.1} parent=0 // pred_fallthru
    _
  // Predicated region
  $region22: #{run.1} parent=0 // pred_check
    _
  $region23: #{run.1} parent=0 // pred_check_branch
    %27 = sbr.rel (0) target = $region25
  $region24: #{run.1} parent=0 // pred_region
    _
  $region25: #{run.1} parent=0 // pred_fallthru
    _
  // Predicated region
  $region26: #{run.1} parent=0 // pred_check
    _
  $region27: #{run.1} parent=0 // pred_check_branch
    %29 = sbr.rel (0) target = $region29
  $region28: #{run.1} parent=0 // pred_region
    _
  $region29: #{run.1} parent=0 // pred_fallthru
    _
  // Predicated region
  $region30: #{run.1} parent=0 // pred_check
    _
  $region31: #{run.1} parent=0 // pred_check_branch
    %31 = sbr.rel (0) target = $region33
  $region32: #{run.1} parent=0 // pred_region
    _
  $region33: #{run.1} parent=0 // pred_fallthru
    _
  // Predicated region
  $region34: #{run.1} parent=0 // pred_check
    _
  $region35: #{run.1} parent=0 // pred_check_branch
    %33 = sbr.rel (0) target = $region37
  $region36: #{run.1} parent=0 // pred_region
    _
  $region37: #{run.1} parent=0 // pred_fallthru
    _
  // Predicated region
  $region38: #{run.1} parent=0 // pred_check
    _
  $region39: #{run.1} parent=0 // pred_check_branch
    %35 = sbr.rel (0) target = $region41
  $region40: #{run.1} parent=0 // pred_region
    _
  $region41: #{run.1} parent=0 // pred_fallthru
    _
  // Predicated region
  $region42: #{run.1} parent=0 // pred_check
    _
  $region43: #{run.1} parent=0 // pred_check_branch
    %37 = sbr.rel (0) target = $region45
  $region44: #{run.1} parent=0 // pred_region
    _
  $region45: #{run.1} parent=0 // pred_fallthru
    _
  %v38 = vld [vmem:[%s1] sm:$0x7f]
  %v39 = vld [vmem:[%s0] sm:$0x7f]
  %41 = vset.pattern.permute.xlu0 1
  %42 = vperm.xlu0 %41, %v38
  %v43 = vpop.permute.xlu0 %42
  %v45 = vmin.f32 %v39, %v43
  %46 = vset.pattern.permute.xlu0 0
  %47 = vperm.xlu0 %46, %v38
  %v48 = vpop.permute.xlu0 %47
  %v50 = vmax.f32 %v45, %v48
  %51 = vset.pattern.permute.xlu0 2
  %52 = vperm.xlu0 %51, %v38
  %v53 = vpop.permute.xlu0 %52
  %v55 = vsub.f32 %v50, %v53
  %56 = vset.pattern.permute.xlu0 3
  %57 = vperm.xlu0 %56, %v38
  %v58 = vpop.permute.xlu0 %57
  %v60 = vmul.f32 %v55, %v58
  %v61 = vcvt.f32.s32.to.zero.pseudo %v60
  %v62 = vlaneseq
  %v63 = vshrl.u32 %v62, 7
  %v64 = vlaneseq
  %v65 = vshrl.u32 %v64, 7
  %v66 = vsub.s32 5, %v65
  %v67 = vrot.slane %v61, %v66
  %vm68 = vcmp.eq.s32.totalorder %v63, %v67
  %v69 = vsel %vm68, 1, 0
  %v70 = vcvt.s32.f32 %v69
  %v71 = vlaneseq
  %v72 = vshrl.u32 %v71, 7
  %v73 = vsub.s32 6, %v72
  %v74 = vrot.slane %v61, %v73
  %vm75 = vcmp.eq.s32.totalorder %v63, %v74
  %v76 = vsel %vm75, 1, 0
  %v77 = vcvt.s32.f32 %v76
  %78 = vset.pattern.permute.xlu0 5
  %79 = vperm.xlu0 %78, %v38
  %v80 = vpop.permute.xlu0 %79
  %v82 = vadd.f32 %v80, 0.0
  %v83 = vld [vmem:[%s2] sm:$0x7]
  %85 = vset.pattern.permute.xlu0 0
  %86 = vperm.xlu0 %85, %v83
  %v87 = vpop.permute.xlu0 %86
  %v89 = vmul.f32 %v70, %v87
  %vm90 = vcmask 1042432
  %v91 = vsel %vm90, %v89, 0.0
  %v92 = vrot.slane %v91, 4
  %v93 = vadd.f32 %v91, %v92
  %v94 = vrot.slane %v93, 2
  %v95 = vadd.f32 %v93, %v94
  %v96 = vrot.slane %v95, 1
  %v97 = vadd.f32 %v95, %v96
  %98 = vset.pattern.permute.xlu0 4
  %99 = vperm.xlu0 %98, %v38
  %v100 = vpop.permute.xlu0 %99
  %v102 = vmul.f32 %v97, %v100
  %v104 = vrot.slane %v102, 5
  %v106 = vadd.f32 %v82, %v104
  %v107 = vld [vmem:[%s3] sm:$0xf]
  %109 = vset.pattern.permute.xlu0 0
  %110 = vperm.xlu0 %109, %v107
  %v111 = vpop.permute.xlu0 %110
  %v113 = vmul.f32 %v77, %v111
  %vm114 = vcmask 1043456
  %v115 = vsel %vm114, %v113, 0.0
  %v116 = vrot.slane %v115, 4
  %v117 = vadd.f32 %v115, %v116
  %v118 = vrot.slane %v117, 2
  %v119 = vadd.f32 %v117, %v118
  %v120 = vrot.slane %v119, 1
  %v121 = vadd.f32 %v119, %v120
  %v122 = vmul.f32 %v121, %v100
  %v124 = vrot.slane %v122, 6
  %v126 = vadd.f32 %v106, %v124
  %v127 = vld [vmem:[%s4] sm:$0xff]
  %v128 = vld [vmem:[%s4 + $0x8] sm:$0xff]
  %v129 = vld [vmem:[%s4 + $0x10] sm:$0xff]
  %v130 = vld [vmem:[%s4 + $0x18] sm:$0xff]
  %v131 = vld [vmem:[%s4 + $0x20] sm:$0xff]
  %v132 = vld [vmem:[%s5] sm:$0xff]
  %v133 = vld [vmem:[%s5 + $0x8] sm:$0xff]
  %v134 = vld [vmem:[%s5 + $0x10] sm:$0xff]
  %v135 = vld [vmem:[%s5 + $0x18] sm:$0xff]
  %v136 = vld [vmem:[%s5 + $0x20] sm:$0xff]
  %138 = vset.pattern.permute.xlu0 0
  %139 = vperm.xlu0 %138, %v132
  %v140 = vpop.permute.xlu0 %139
  %143 = vset.pattern.permute.xlu0 0
  %144 = vperm.xlu0 %143, %v133
  %v145 = vpop.permute.xlu0 %144
  %148 = vset.pattern.permute.xlu0 0
  %149 = vperm.xlu0 %148, %v134
  %v150 = vpop.permute.xlu0 %149
  %153 = vset.pattern.permute.xlu0 0
  %154 = vperm.xlu0 %153, %v135
  %v155 = vpop.permute.xlu0 %154
  %158 = vset.pattern.permute.xlu0 0
  %159 = vperm.xlu0 %158, %v136
  %v160 = vpop.permute.xlu0 %159
  %vm162 = vcmask 56320
  %v164 = vsel %vm162, %v127, 0
  %v167 = vsel %vm162, %v128, 0
  %v170 = vsel %vm162, %v129, 0
  %v173 = vsel %vm162, %v130, 0
  %v176 = vsel %vm162, %v131, 0
  %vm178 = vcmask 1046528
  %v180 = vsel %vm178, %v60, 0
  %182 = vmatprep.subr.mxu0 0.0
  %183 = vmatpush1.msra.mxu0 0.0
  %184 = vmatprep.subr.mxu0 0.0
  %185 = vmatpush1.msra.mxu0 0.0
  %186 = vmatprep.subr.mxu0 0.0
  %187 = vmatpush1.msra.mxu0 0.0
  %188 = vmatprep.subr.mxu0 0.0
  %189 = vmatpush1.msra.mxu0 0.0
  %190 = vmatprep.subr.mxu0 0.0
  %191 = vmatpush1.msra.mxu0 0.0
  %192 = vmatprep.subr.mxu0 0.0
  %193 = vmatpush1.msra.mxu0 0.0
  %194 = vmatprep.subr.mxu0 0.0
  %195 = vmatpush1.msra.mxu0 0.0
  %196 = vmatprep.subr.mxu0 0.0
  %197 = vmatpush1.msra.mxu0 0.0
  %198 = vmatprep.subr.mxu0 0.0
  %199 = vmatpush1.msra.mxu0 0.0
  %200 = vmatprep.subr.mxu0 0.0
  %201 = vmatpush1.msra.mxu0 0.0
  %202 = vmatprep.subr.mxu0 0.0
  %203 = vmatpush1.msra.mxu0 0.0
  %204 = vmatprep.subr.mxu0 0.0
  %205 = vmatpush1.msra.mxu0 0.0
  %206 = vmatprep.subr.mxu0 0.0
  %207 = vmatpush1.msra.mxu0 0.0
  %208 = vmatprep.subr.mxu0 0.0
  %209 = vmatpush1.msra.mxu0 0.0
  %210 = vmatprep.subr.mxu0 0.0
  %211 = vmatpush1.msra.mxu0 0.0
  %212 = vmatprep.subr.mxu0 0.0
  %213 = vmatpush1.msra.mxu0 %v180
  %214 = vmatprep.subr.mxu0 0.0
  %215 = vmatpush2.msra.mxu0 0.0
  %216 = vmatprep.subr.mxu0 0.0
  %217 = vmatpush2.msra.mxu0 0.0
  %218 = vmatprep.subr.mxu0 0.0
  %219 = vmatpush2.msra.mxu0 0.0
  %220 = vmatprep.subr.mxu0 0.0
  %221 = vmatpush2.msra.mxu0 0.0
  %222 = vmatprep.subr.mxu0 0.0
  %223 = vmatpush2.msra.mxu0 0.0
  %224 = vmatprep.subr.mxu0 0.0
  %225 = vmatpush2.msra.mxu0 0.0
  %226 = vmatprep.subr.mxu0 0.0
  %227 = vmatpush2.msra.mxu0 0.0
  %228 = vmatprep.subr.mxu0 0.0
  %229 = vmatpush2.msra.mxu0 0.0
  %230 = vmatprep.subr.mxu0 0.0
  %231 = vmatpush2.msra.mxu0 0.0
  %232 = vmatprep.subr.mxu0 0.0
  %233 = vmatpush2.msra.mxu0 0.0
  %234 = vmatprep.subr.mxu0 0.0
  %235 = vmatpush2.msra.mxu0 0.0
  %236 = vmatprep.subr.mxu0 0.0
  %237 = vmatpush2.msra.mxu0 0.0
  %238 = vmatprep.subr.mxu0 0.0
  %239 = vmatpush2.msra.mxu0 0.0
  %240 = vmatprep.subr.mxu0 0.0
  %241 = vmatpush2.msra.mxu0 0.0
  %242 = vmatprep.subr.mxu0 0.0
  %243 = vmatpush2.msra.mxu0 0.0
  %244 = vmatprep.subr.mxu0 0.0
  %245 = vmatpush2.msra.mxu0 0.0
  %246 = vmatprep.mubr.f32.mxu0 0.0
  %247 = vmatmul.mubr.f32.gmra.mxu0 %v164
  %v248 = vpop.f32.mrf.mxu0
  %v249 = vadd.f32 %v140, %v248
  %v250 = vpop.f32.mrf.mxu0
  %251 = vmatprep.mubr.f32.mxu0 0.0
  %252 = vmatmul.mubr.f32.gmra.mxu0 %v167
  %v253 = vpop.f32.mrf.mxu0
  %v254 = vadd.f32 %v145, %v253
  %v255 = vpop.f32.mrf.mxu0
  %256 = vmatprep.mubr.f32.mxu0 0.0
  %257 = vmatmul.mubr.f32.gmra.mxu0 %v170
  %v258 = vpop.f32.mrf.mxu0
  %v259 = vadd.f32 %v150, %v258
  %v260 = vpop.f32.mrf.mxu0
  %261 = vmatprep.mubr.f32.mxu0 0.0
  %262 = vmatmul.mubr.f32.gmra.mxu0 %v173
  %v263 = vpop.f32.mrf.mxu0
  %v264 = vadd.f32 %v155, %v263
  %v265 = vpop.f32.mrf.mxu0
  %266 = vmatprep.mubr.f32.mxu0 0.0
  %267 = vmatmul.mubr.f32.gmra.mxu0 %v176
  %v268 = vpop.f32.mrf.mxu0
  %v269 = vadd.f32 %v160, %v268
  %v270 = vpop.f32.mrf.mxu0
  %271 = vdwg.mxu0
  %v272 = vmax.f32 %v249, 0.0
  %v273 = vmax.f32 %v254, 0.0
  %v274 = vmax.f32 %v259, 0.0
  %v275 = vmax.f32 %v264, 0.0
  %v276 = vmax.f32 %v269, 0.0
  %v277 = vld [vmem:[%s6] sm:$0xff]
  %v278 = vld [vmem:[%s6 + $0x8] sm:$0xff]
  %v279 = vld [vmem:[%s6 + $0x10] sm:$0xf]
  %v280 = vld [vmem:[%s7] sm:$0xff]
  %v281 = vld [vmem:[%s7 + $0x8] sm:$0xff]
  %v282 = vld [vmem:[%s7 + $0x10] sm:$0xf]
  %284 = vset.pattern.permute.xlu0 0
  %285 = vperm.xlu0 %284, %v280
  %v286 = vpop.permute.xlu0 %285
  %289 = vset.pattern.permute.xlu0 0
  %290 = vperm.xlu0 %289, %v281
  %v291 = vpop.permute.xlu0 %290
  %294 = vset.pattern.permute.xlu0 0
  %295 = vperm.xlu0 %294, %v282
  %v296 = vpop.permute.xlu0 %295
  %vm298 = vcmask 326656
  %v300 = vsel %vm298, %v277, 0
  %v303 = vsel %vm298, %v278, 0
  %v306 = vsel %vm298, %v279, 0
  %308 = vmatprep.subr.mxu0 0.0
  %309 = vmatpush1.msra.mxu0 0.0
  %310 = vmatprep.subr.mxu0 0.0
  %311 = vmatpush1.msra.mxu0 0.0
  %312 = vmatprep.subr.mxu0 0.0
  %313 = vmatpush1.msra.mxu0 0.0
  %314 = vmatprep.subr.mxu0 0.0
  %315 = vmatpush1.msra.mxu0 0.0
  %316 = vmatprep.subr.mxu0 0.0
  %317 = vmatpush1.msra.mxu0 0.0
  %318 = vmatprep.subr.mxu0 0.0
  %319 = vmatpush1.msra.mxu0 0.0
  %320 = vmatprep.subr.mxu0 0.0
  %321 = vmatpush1.msra.mxu0 0.0
  %322 = vmatprep.subr.mxu0 0.0
  %323 = vmatpush1.msra.mxu0 0.0
  %324 = vmatprep.subr.mxu0 0.0
  %325 = vmatpush1.msra.mxu0 0.0
  %326 = vmatprep.subr.mxu0 0.0
  %327 = vmatpush1.msra.mxu0 0.0
  %328 = vmatprep.subr.mxu0 0.0
  %329 = vmatpush1.msra.mxu0 0.0
  %330 = vmatprep.subr.mxu0 0.0
  %331 = vmatpush1.msra.mxu0 %v276
  %332 = vmatprep.subr.mxu0 0.0
  %333 = vmatpush1.msra.mxu0 %v275
  %334 = vmatprep.subr.mxu0 0.0
  %335 = vmatpush1.msra.mxu0 %v274
  %336 = vmatprep.subr.mxu0 0.0
  %337 = vmatpush1.msra.mxu0 %v273
  %338 = vmatprep.subr.mxu0 0.0
  %339 = vmatpush1.msra.mxu0 %v272
  %340 = vmatprep.subr.mxu0 0.0
  %341 = vmatpush2.msra.mxu0 0.0
  %342 = vmatprep.subr.mxu0 0.0
  %343 = vmatpush2.msra.mxu0 0.0
  %344 = vmatprep.subr.mxu0 0.0
  %345 = vmatpush2.msra.mxu0 0.0
  %346 = vmatprep.subr.mxu0 0.0
  %347 = vmatpush2.msra.mxu0 0.0
  %348 = vmatprep.subr.mxu0 0.0
  %349 = vmatpush2.msra.mxu0 0.0
  %350 = vmatprep.subr.mxu0 0.0
  %351 = vmatpush2.msra.mxu0 0.0
  %352 = vmatprep.subr.mxu0 0.0
  %353 = vmatpush2.msra.mxu0 0.0
  %354 = vmatprep.subr.mxu0 0.0
  %355 = vmatpush2.msra.mxu0 0.0
  %356 = vmatprep.subr.mxu0 0.0
  %357 = vmatpush2.msra.mxu0 0.0
  %358 = vmatprep.subr.mxu0 0.0
  %359 = vmatpush2.msra.mxu0 0.0
  %360 = vmatprep.subr.mxu0 0.0
  %361 = vmatpush2.msra.mxu0 0.0
  %362 = vmatprep.subr.mxu0 0.0
  %363 = vmatpush2.msra.mxu0 0.0
  %364 = vmatprep.subr.mxu0 0.0
  %365 = vmatpush2.msra.mxu0 0.0
  %366 = vmatprep.subr.mxu0 0.0
  %367 = vmatpush2.msra.mxu0 0.0
  %368 = vmatprep.subr.mxu0 0.0
  %369 = vmatpush2.msra.mxu0 0.0
  %370 = vmatprep.subr.mxu0 0.0
  %371 = vmatpush2.msra.mxu0 0.0
  %372 = vmatprep.mubr.f32.mxu0 0.0
  %373 = vmatmul.mubr.f32.gmra.mxu0 %v300
  %v374 = vpop.f32.mrf.mxu0
  %v375 = vadd.f32 %v286, %v374
  %v376 = vpop.f32.mrf.mxu0
  %377 = vmatprep.mubr.f32.mxu0 0.0
  %378 = vmatmul.mubr.f32.gmra.mxu0 %v303
  %v379 = vpop.f32.mrf.mxu0
  %v380 = vadd.f32 %v291, %v379
  %v381 = vpop.f32.mrf.mxu0
  %382 = vmatprep.mubr.f32.mxu0 0.0
  %383 = vmatmul.mubr.f32.gmra.mxu0 %v306
  %v384 = vpop.f32.mrf.mxu0
  %v385 = vadd.f32 %v296, %v384
  %v386 = vpop.f32.mrf.mxu0
  %387 = vdwg.mxu0
  %v388 = vmax.f32 %v375, 0.0
  %v389 = vmax.f32 %v380, 0.0
  %v390 = vmax.f32 %v385, 0.0
  %v391 = vld [vmem:[%s8] sm:$0x1f]
  %v392 = vld [vmem:[%s9] sm:$0x1f]
  %394 = vset.pattern.permute.xlu0 0
  %395 = vperm.xlu0 %394, %v392
  %v396 = vpop.permute.xlu0 %395
  %vm398 = vcmask 162816
  %v400 = vsel %vm398, %v391, 0
  %v403 = vsel %vm114, %v390, 0
  %405 = vmatprep.subr.mxu0 0.0
  %406 = vmatpush1.msra.mxu0 0.0
  %407 = vmatprep.subr.mxu0 0.0
  %408 = vmatpush1.msra.mxu0 0.0
  %409 = vmatprep.subr.mxu0 0.0
  %410 = vmatpush1.msra.mxu0 0.0
  %411 = vmatprep.subr.mxu0 0.0
  %412 = vmatpush1.msra.mxu0 0.0
  %413 = vmatprep.subr.mxu0 0.0
  %414 = vmatpush1.msra.mxu0 0.0
  %415 = vmatprep.subr.mxu0 0.0
  %416 = vmatpush1.msra.mxu0 0.0
  %417 = vmatprep.subr.mxu0 0.0
  %418 = vmatpush1.msra.mxu0 0.0
  %419 = vmatprep.subr.mxu0 0.0
  %420 = vmatpush1.msra.mxu0 0.0
  %421 = vmatprep.subr.mxu0 0.0
  %422 = vmatpush1.msra.mxu0 0.0
  %423 = vmatprep.subr.mxu0 0.0
  %424 = vmatpush1.msra.mxu0 0.0
  %425 = vmatprep.subr.mxu0 0.0
  %426 = vmatpush1.msra.mxu0 0.0
  %427 = vmatprep.subr.mxu0 0.0
  %428 = vmatpush1.msra.mxu0 0.0
  %429 = vmatprep.subr.mxu0 0.0
  %430 = vmatpush1.msra.mxu0 0.0
  %431 = vmatprep.subr.mxu0 0.0
  %432 = vmatpush1.msra.mxu0 %v403
  %433 = vmatprep.subr.mxu0 0.0
  %434 = vmatpush1.msra.mxu0 %v389
  %435 = vmatprep.subr.mxu0 0.0
  %436 = vmatpush1.msra.mxu0 %v388
  %437 = vmatprep.subr.mxu0 0.0
  %438 = vmatpush2.msra.mxu0 0.0
  %439 = vmatprep.subr.mxu0 0.0
  %440 = vmatpush2.msra.mxu0 0.0
  %441 = vmatprep.subr.mxu0 0.0
  %442 = vmatpush2.msra.mxu0 0.0
  %443 = vmatprep.subr.mxu0 0.0
  %444 = vmatpush2.msra.mxu0 0.0
  %445 = vmatprep.subr.mxu0 0.0
  %446 = vmatpush2.msra.mxu0 0.0
  %447 = vmatprep.subr.mxu0 0.0
  %448 = vmatpush2.msra.mxu0 0.0
  %449 = vmatprep.subr.mxu0 0.0
  %450 = vmatpush2.msra.mxu0 0.0
  %451 = vmatprep.subr.mxu0 0.0
  %452 = vmatpush2.msra.mxu0 0.0
  %453 = vmatprep.subr.mxu0 0.0
  %454 = vmatpush2.msra.mxu0 0.0
  %455 = vmatprep.subr.mxu0 0.0
  %456 = vmatpush2.msra.mxu0 0.0
  %457 = vmatprep.subr.mxu0 0.0
  %458 = vmatpush2.msra.mxu0 0.0
  %459 = vmatprep.subr.mxu0 0.0
  %460 = vmatpush2.msra.mxu0 0.0
  %461 = vmatprep.subr.mxu0 0.0
  %462 = vmatpush2.msra.mxu0 0.0
  %463 = vmatprep.subr.mxu0 0.0
  %464 = vmatpush2.msra.mxu0 0.0
  %465 = vmatprep.subr.mxu0 0.0
  %466 = vmatpush2.msra.mxu0 0.0
  %467 = vmatprep.subr.mxu0 0.0
  %468 = vmatpush2.msra.mxu0 0.0
  %469 = vmatprep.mubr.f32.mxu0 0.0
  %470 = vmatmul.mubr.f32.gmra.mxu0 %v400
  %v471 = vpop.f32.mrf.mxu0
  %v472 = vadd.f32 %v396, %v471
  %v473 = vpop.f32.mrf.mxu0
  %474 = vdwg.mxu0
  %v475 = vld [vmem:[%s10] sm:$0x1f]
  %477 = vset.pattern.permute.xlu0 0
  %478 = vperm.xlu0 %477, %v475
  %v479 = vpop.permute.xlu0 %478
  %v481 = vmul.f32 %v472, %v479
  %vm482 = vcmask 1044480
  %v483 = vsel %vm482, %v481, 0.0
  %v484 = vrot.slane %v483, 4
  %v485 = vadd.f32 %v483, %v484
  %v486 = vrot.slane %v485, 2
  %v487 = vadd.f32 %v485, %v486
  %v488 = vrot.slane %v487, 1
  %v489 = vadd.f32 %v487, %v488
  %v490 = vadd.f32 %v126, %v489
  %491 = vst [vmem:[%s11] sm:$0x1] %v490
  // Predicated region
  $region46: #{run.1} parent=0 // pred_check
    _
  $region47: #{run.1} parent=0 // pred_check_branch
    %493 = sbr.rel (0) target = $region49
  $region48: #{run.1} parent=0 // pred_region
    _
  $region49: #{run.1} parent=0 // pred_fallthru
    _
  // Predicated region
  $region50: #{run.1} parent=0 // pred_check
    _
  $region51: #{run.1} parent=0 // pred_check_branch
    %495 = sbr.rel (0) target = $region53
  $region52: #{run.1} parent=0 // pred_region
    _
  $region53: #{run.1} parent=0 // pred_fallthru
    _

</llo_original>
